<compile_context>
chip_gen: v5e
topology: v5e:2x2
jax: 0.10.0
libtpu: 0.0.40
codegen_flags: <defaults>
</compile_context>

<pallas_src>
import functools

import jax
import jax.numpy as jnp
from jax.experimental import pallas as pl
from jax.experimental.pallas import tpu as pltpu

_MAX_BLOCK_ROWS = 512                 # per-stream rows per grid step
_VMEM_LIMIT = 32 * 1024 * 1024        # v7x-safe scoped VMEM cap
_WIDTH = 384                          # 3 full vregs of lanes; 16*24 = 2*192


def _round_up(a, b):
    return (a + b - 1) // b * b


def _num_blocks(n_kernel_rows, max_block=_MAX_BLOCK_ROWS):
    """Grid steps needed for one stream: big blocks, but >=2 steps when rows
    allow (so dimension_semantics=('parallel',) can shard across cores)."""
    n_kernel_rows = max(n_kernel_rows, 1)
    nb = pl.cdiv(n_kernel_rows, max_block)
    if n_kernel_rows >= 16:           # room for two >=8-row blocks
        nb = max(nb, 2)
    return nb


def _sum_matrix(width, group, ng):
    """(width, ng) bf16 0/1 matrix: M[j, g] = 1 iff lane j belongs to group g."""
    j = jax.lax.broadcasted_iota(jnp.int32, (width, ng), 0)
    g = jax.lax.broadcasted_iota(jnp.int32, (width, ng), 1)
    lo = g * group
    return ((j >= lo) & (j < lo + group)).astype(jnp.bfloat16)


def _bcast_matrix(ng, width, group):
    """(ng, width) bf16 0/1 matrix: M[g, j] = 1 iff lane j belongs to group g."""
    g = jax.lax.broadcasted_iota(jnp.int32, (ng, width), 0)
    j = jax.lax.broadcasted_iota(jnp.int32, (ng, width), 1)
    lo = g * group
    return ((j >= lo) & (j < lo + group)).astype(jnp.bfloat16)


def _hilo_dot(v_f32, m_bf16):
    """f32 @ {0,1}-matrix on the MXU via a bf16 hi/lo split (error ~2^-17),
    f32 accumulation.  Keeps the VPU/XLU free and is precision-independent."""
    hi = v_f32.astype(jnp.bfloat16)
    lo = (v_f32 - hi.astype(jnp.float32)).astype(jnp.bfloat16)
    return (jnp.dot(hi, m_bf16, preferred_element_type=jnp.float32) +
            jnp.dot(lo, m_bf16, preferred_element_type=jnp.float32))


def _fused_kernel(x_ref, y_ref, w3_ref, w4_ref, xo_ref, yo_ref, zo_ref, *,
                  eps_x, eps_y, eps_z, gx, gy, seg, width):
    ngx = width // gx          # 16  groups of 24 per kernel row (x stream)
    ngy = width // gy          # 24  groups of 16 per kernel row (y stream)
    nseg = width // seg        # 2   logical rows (192-wide) per kernel row
    gpseg = seg // gy          # 12  groups per logical row

    # ---- x = rms_norm(x, (24,), w3) -------------------------------------
    x = x_ref[...].astype(jnp.float32)
    ms_x = _hilo_dot(x * x, _sum_matrix(width, gx, ngx)) * (1.0 / gx)
    scale_x = _hilo_dot(jax.lax.rsqrt(ms_x + eps_x), _bcast_matrix(ngx, width, gx))
    xo_ref[...] = (x * scale_x * w3_ref[...]).astype(xo_ref.dtype)

    # ---- y = rms_norm(y, (16,), None) ------------------------------------
    y = y_ref[...].astype(jnp.float32)
    ms_y = _hilo_dot(y * y, _sum_matrix(width, gy, ngy)) * (1.0 / gy)   # (rows, 24)
    rs_y = jax.lax.rsqrt(ms_y + eps_y)
    y_n = y * _hilo_dot(rs_y, _bcast_matrix(ngy, width, gy))
    yo_ref[...] = y_n.astype(yo_ref.dtype)

    # ---- z = rms_norm(y_updated, (12, 16), w4, eps=1e-3) ------------------
    # mean(y_n^2) over each 192-lane segment, derived analytically:
    #   within one 16-group, mean(y_n^2) = ms_y / (ms_y + eps_y)
    r = ms_y * (rs_y * rs_y)                                   # (rows, 24)
    ms_z = _hilo_dot(r, _sum_matrix(ngy, gpseg, nseg)) * (1.0 / gpseg)  # (rows, 2)
    scale_z = _hilo_dot(jax.lax.rsqrt(ms_z + eps_z), _bcast_matrix(nseg, width, seg))
    zo_ref[...] = (y_n * scale_z * w4_ref[...]).astype(zo_ref.dtype)


def _pack_rows(flat, n_kernel_rows, width):
    """flat: (n, d). Pack width//d consecutive d-rows per kernel row, zero-pad
    to exactly n_kernel_rows kernel rows.  Row-major reshape => free layout."""
    n, d = flat.shape
    need = n_kernel_rows * (width // d)
    if need != n:
        flat = jnp.pad(flat, ((0, need - n), (0, 0)))
    return flat.reshape(n_kernel_rows, width)


def model_forward(x, y, w3, w4):
    # torch F.rms_norm default eps is finfo(dtype).eps when eps is None
    eps_x = float(jnp.finfo(x.dtype).eps)
    eps_y = float(jnp.finfo(y.dtype).eps)
    eps_z = 1e-3

    dx = x.shape[-1]                       # 24
    gy = y.shape[-1]                       # 16
    seg = y.shape[-2] * y.shape[-1]        # 192
    width = _WIDTH                         # 384
    assert width % dx == 0 and width % seg == 0 and seg % gy == 0

    nx = x.size // dx                      # number of 24-wide logical rows
    ny = y.size // seg                     # number of 192-wide logical rows
    nx_kr = pl.cdiv(nx, width // dx)       # kernel rows for the x stream
    ny_kr = pl.cdiv(ny, width // seg)      # kernel rows for the y stream

    # Same number of grid steps for both streams (no pl.when / clamped index
    # maps needed); each stream gets its own rows-per-block.
    n_blocks = max(_num_blocks(nx_kr), _num_blocks(ny_kr))
    # TODO(synk): for sub-32-bit inputs round the sublane multiple up to 16/32.
    bx = _round_up(pl.cdiv(nx_kr, n_blocks), 8)
    by = _round_up(pl.cdiv(ny_kr, n_blocks), 8)

    x2d = _pack_rows(x.reshape(nx, dx), n_blocks * bx, width)
    y2d = _pack_rows(y.reshape(ny, seg), n_blocks * by, width)
    w3_row = jnp.tile(w3.astype(x.dtype).reshape(1, dx), (1, width // dx))
    w4_row = jnp.tile(w4.astype(y.dtype).reshape(1, seg), (1, width // seg))

    kernel = functools.partial(_fused_kernel, eps_x=eps_x, eps_y=eps_y,
                               eps_z=eps_z, gx=dx, gy=gy, seg=seg, width=width)
    # Constant (0,0) index_map blocks (w3_row / w4_row) are fetched once and
    # stay resident across grid steps (revisit logic), so no per-step re-DMA.
    x_o, y_o, z_o = pl.pallas_call(
        kernel,
        out_shape=(jax.ShapeDtypeStruct(x2d.shape, x.dtype),
                   jax.ShapeDtypeStruct(y2d.shape, y.dtype),
                   jax.ShapeDtypeStruct(y2d.shape, y.dtype)),
        grid_spec=pltpu.PrefetchScalarGridSpec(
            num_scalar_prefetch=0,
            grid=(n_blocks,),
            in_specs=[pl.BlockSpec((bx, width), lambda i: (i, 0)),
                      pl.BlockSpec((by, width), lambda i: (i, 0)),
                      pl.BlockSpec((1, width), lambda i: (0, 0)),
                      pl.BlockSpec((1, width), lambda i: (0, 0))],
            out_specs=[pl.BlockSpec((bx, width), lambda i: (i, 0)),
                       pl.BlockSpec((by, width), lambda i: (i, 0)),
                       pl.BlockSpec((by, width), lambda i: (i, 0))],
        ),
        compiler_params=pltpu.CompilerParams(
            dimension_semantics=("parallel",),
            vmem_limit_bytes=_VMEM_LIMIT),
    )(x2d, y2d, w3_row, w4_row)

    x_out = x_o.reshape(-1, dx)[:nx].reshape(x.shape)
    y_out = y_o.reshape(-1, seg)[:ny].reshape(y.shape)
    z_out = z_o.reshape(-1, seg)[:ny].reshape(y.shape)
    return x_out, y_out, z_out


def _ref_rms_norm(v, ndims, w, eps):
    axes = tuple(range(v.ndim - ndims, v.ndim))
    ms = jnp.mean(v.astype(jnp.float32) ** 2, axis=axes, keepdims=True)
    out = v * jax.lax.rsqrt(ms + eps)
    if w is not None:
        out = out * w
    return out.astype(v.dtype)


if __name__ == "__main__":
    key = jax.random.PRNGKey(0)
    k1, k2, k3, k4 = jax.random.split(key, 4)

    # deterministic "parameters" (torch.rand -> uniform [0, 1))
    w3 = jax.random.uniform(k1, (24,), dtype=jnp.float32)
    w4 = jax.random.uniform(k2, (12, 16), dtype=jnp.float32)

    # small inputs consistent with the forward: x last dim 24, y last dims (12, 16)
    x = jax.random.uniform(k3, (2, 3, 12, 24), dtype=jnp.float32)
    y = jax.random.uniform(k4, (2, 5, 12, 16), dtype=jnp.float32)

    fwd = jax.jit(model_forward)
    x_out, y_out, z_out = jax.block_until_ready(fwd(x, y, w3, w4))

    # sanity check vs pure-JAX reference
    eps32 = float(jnp.finfo(jnp.float32).eps)
    x_ref = _ref_rms_norm(x, 1, w3, eps32)
    y_ref = _ref_rms_norm(y, 1, None, eps32)
    z_ref = _ref_rms_norm(y_ref, 2, w4, 1e-3)
    assert jnp.allclose(x_out, x_ref, atol=1e-4), "x mismatch"
    assert jnp.allclose(y_out, y_ref, atol=1e-4), "y mismatch"
    assert jnp.allclose(z_out, z_ref, atol=1e-4), "z mismatch"

    print("KERNEL_OK")
</pallas_src>

<mosaic_0001>
module attributes {stable_mosaic.version = 11 : i64} {
  func.func @_fused_kernel(%arg0: i32, %arg1: memref<8x384xf32, #tpu.memory_space<vmem>>, %arg2: memref<8x384xf32, #tpu.memory_space<vmem>>, %arg3: memref<1x384xf32, #tpu.memory_space<vmem>>, %arg4: memref<1x384xf32, #tpu.memory_space<vmem>>, %arg5: memref<8x384xf32, #tpu.memory_space<vmem>>, %arg6: memref<8x384xf32, #tpu.memory_space<vmem>>, %arg7: memref<8x384xf32, #tpu.memory_space<vmem>>) attributes {dimension_semantics = [#tpu.dimension_semantics<parallel>], iteration_bounds = array<i64: 1>, scalar_prefetch = 0 : i64, scratch_operands = 0 : i64, tpu.core_type = #tpu.core_type<tc>, window_params = [{transform_indices = @transform_0, window_bounds = array<i64: 8, 384>}, {transform_indices = @transform_1, window_bounds = array<i64: 8, 384>}, {pipeline_mode = #tpu.pipeline_mode<synchronous>, transform_indices = @transform_2, window_bounds = array<i64: 1, 384>}, {pipeline_mode = #tpu.pipeline_mode<synchronous>, transform_indices = @transform_3, window_bounds = array<i64: 1, 384>}, {transform_indices = @transform_4, window_bounds = array<i64: 8, 384>}, {transform_indices = @transform_5, window_bounds = array<i64: 8, 384>}, {transform_indices = @transform_6, window_bounds = array<i64: 8, 384>}]} {
    %c0 = arith.constant 0 : index
    %c0_0 = arith.constant 0 : index
    %0 = vector.load %arg1[%c0, %c0_0] : memref<8x384xf32, #tpu.memory_space<vmem>>, vector<8x384xf32>
    %1 = arith.mulf %0, %0 : vector<8x384xf32>
    %2 = tpu.iota {dimensions = array<i32: 0>} : vector<384x16xi32>
    %3 = tpu.iota {dimensions = array<i32: 1>} : vector<384x16xi32>
    %c24_i32 = arith.constant 24 : i32
    %4 = vector.broadcast %c24_i32 : i32 to vector<384x16xi32>
    %5 = arith.muli %3, %4 : vector<384x16xi32>
    %6 = arith.cmpi sge, %2, %5 : vector<384x16xi32>
    %c24_i32_1 = arith.constant 24 : i32
    %7 = vector.broadcast %c24_i32_1 : i32 to vector<384x16xi32>
    %8 = arith.addi %5, %7 : vector<384x16xi32>
    %9 = arith.cmpi slt, %2, %8 : vector<384x16xi32>
    %10 = arith.andi %6, %9 : vector<384x16xi1>
    %11 = arith.extui %10 : vector<384x16xi1> to vector<384x16xi32>
    %12 = arith.sitofp %11 : vector<384x16xi32> to vector<384x16xf32>
    %13 = arith.truncf %12 : vector<384x16xf32> to vector<384x16xbf16>
    %14 = arith.truncf %1 : vector<8x384xf32> to vector<8x384xbf16>
    %15 = arith.extf %14 : vector<8x384xbf16> to vector<8x384xf32>
    %16 = arith.subf %1, %15 : vector<8x384xf32>
    %17 = arith.truncf %16 : vector<8x384xf32> to vector<8x384xbf16>
    %cst = arith.constant dense<0.000000e+00> : vector<8x16xf32>
    %18 = tpu.matmul %14, %13, %cst {dimension_numbers = #tpu.dot_dimension_numbers<[1], [0], [0], [1], [0, 0, 1, 1], [], []>} : vector<8x384xbf16>, vector<384x16xbf16>, vector<8x16xf32> -> vector<8x16xf32>
    %cst_2 = arith.constant dense<0.000000e+00> : vector<8x16xf32>
    %19 = tpu.matmul %17, %13, %cst_2 {dimension_numbers = #tpu.dot_dimension_numbers<[1], [0], [0], [1], [0, 0, 1, 1], [], []>} : vector<8x384xbf16>, vector<384x16xbf16>, vector<8x16xf32> -> vector<8x16xf32>
    %20 = arith.addf %18, %19 : vector<8x16xf32>
    %cst_3 = arith.constant 0.0416666679 : f32
    %21 = vector.broadcast %cst_3 : f32 to vector<8x16xf32>
    %22 = arith.mulf %20, %21 : vector<8x16xf32>
    %cst_4 = arith.constant 1.1920929E-7 : f32
    %23 = vector.broadcast %cst_4 : f32 to vector<8x16xf32>
    %24 = arith.addf %22, %23 : vector<8x16xf32>
    %25 = math.rsqrt %24 : vector<8x16xf32>
    %26 = tpu.iota {dimensions = array<i32: 0>} : vector<16x384xi32>
    %27 = tpu.iota {dimensions = array<i32: 1>} : vector<16x384xi32>
    %c24_i32_5 = arith.constant 24 : i32
    %28 = vector.broadcast %c24_i32_5 : i32 to vector<16x384xi32>
    %29 = arith.muli %26, %28 : vector<16x384xi32>
    %30 = arith.cmpi sge, %27, %29 : vector<16x384xi32>
    %c24_i32_6 = arith.constant 24 : i32
    %31 = vector.broadcast %c24_i32_6 : i32 to vector<16x384xi32>
    %32 = arith.addi %29, %31 : vector<16x384xi32>
    %33 = arith.cmpi slt, %27, %32 : vector<16x384xi32>
    %34 = arith.andi %30, %33 : vector<16x384xi1>
    %35 = arith.extui %34 : vector<16x384xi1> to vector<16x384xi32>
    %36 = arith.sitofp %35 : vector<16x384xi32> to vector<16x384xf32>
    %37 = arith.truncf %36 : vector<16x384xf32> to vector<16x384xbf16>
    %38 = arith.truncf %25 : vector<8x16xf32> to vector<8x16xbf16>
    %39 = arith.extf %38 : vector<8x16xbf16> to vector<8x16xf32>
    %40 = arith.subf %25, %39 : vector<8x16xf32>
    %41 = arith.truncf %40 : vector<8x16xf32> to vector<8x16xbf16>
    %cst_7 = arith.constant dense<0.000000e+00> : vector<8x384xf32>
    %42 = tpu.matmul %38, %37, %cst_7 {dimension_numbers = #tpu.dot_dimension_numbers<[1], [0], [0], [1], [0, 0, 1, 1], [], []>} : vector<8x16xbf16>, vector<16x384xbf16>, vector<8x384xf32> -> vector<8x384xf32>
    %cst_8 = arith.constant dense<0.000000e+00> : vector<8x384xf32>
    %43 = tpu.matmul %41, %37, %cst_8 {dimension_numbers = #tpu.dot_dimension_numbers<[1], [0], [0], [1], [0, 0, 1, 1], [], []>} : vector<8x16xbf16>, vector<16x384xbf16>, vector<8x384xf32> -> vector<8x384xf32>
    %44 = arith.addf %42, %43 : vector<8x384xf32>
    %45 = arith.mulf %0, %44 : vector<8x384xf32>
    %c0_9 = arith.constant 0 : index
    %c0_10 = arith.constant 0 : index
    %46 = vector.load %arg3[%c0_9, %c0_10] : memref<1x384xf32, #tpu.memory_space<vmem>>, vector<1x384xf32>
    %47 = vector.broadcast %46 : vector<1x384xf32> to vector<8x384xf32>
    %48 = arith.mulf %45, %47 : vector<8x384xf32>
    %c0_11 = arith.constant 0 : index
    %c0_12 = arith.constant 0 : index
    %49 = vector.load %arg5[%c0_11, %c0_12] : memref<8x384xf32, #tpu.memory_space<vmem>>, vector<8x384xf32>
    tpu.vector_store %arg5[%c0_11, %c0_12], %48 {strides = array<i32>} : memref<8x384xf32, #tpu.memory_space<vmem>>, vector<8x384xf32>,
    %c0_13 = arith.constant 0 : index
    %c0_14 = arith.constant 0 : index
    %50 = vector.load %arg2[%c0_13, %c0_14] : memref<8x384xf32, #tpu.memory_space<vmem>>, vector<8x384xf32>
    %51 = arith.mulf %50, %50 : vector<8x384xf32>
    %52 = tpu.iota {dimensions = array<i32: 0>} : vector<384x24xi32>
    %53 = tpu.iota {dimensions = array<i32: 1>} : vector<384x24xi32>
    %c16_i32 = arith.constant 16 : i32
    %54 = vector.broadcast %c16_i32 : i32 to vector<384x24xi32>
    %55 = arith.muli %53, %54 : vector<384x24xi32>
    %56 = arith.cmpi sge, %52, %55 : vector<384x24xi32>
    %c16_i32_15 = arith.constant 16 : i32
    %57 = vector.broadcast %c16_i32_15 : i32 to vector<384x24xi32>
    %58 = arith.addi %55, %57 : vector<384x24xi32>
    %59 = arith.cmpi slt, %52, %58 : vector<384x24xi32>
    %60 = arith.andi %56, %59 : vector<384x24xi1>
    %61 = arith.extui %60 : vector<384x24xi1> to vector<384x24xi32>
    %62 = arith.sitofp %61 : vector<384x24xi32> to vector<384x24xf32>
    %63 = arith.truncf %62 : vector<384x24xf32> to vector<384x24xbf16>
    %64 = arith.truncf %51 : vector<8x384xf32> to vector<8x384xbf16>
    %65 = arith.extf %64 : vector<8x384xbf16> to vector<8x384xf32>
    %66 = arith.subf %51, %65 : vector<8x384xf32>
    %67 = arith.truncf %66 : vector<8x384xf32> to vector<8x384xbf16>
    %cst_16 = arith.constant dense<0.000000e+00> : vector<8x24xf32>
    %68 = tpu.matmul %64, %63, %cst_16 {dimension_numbers = #tpu.dot_dimension_numbers<[1], [0], [0], [1], [0, 0, 1, 1], [], []>} : vector<8x384xbf16>, vector<384x24xbf16>, vector<8x24xf32> -> vector<8x24xf32>
    %cst_17 = arith.constant dense<0.000000e+00> : vector<8x24xf32>
    %69 = tpu.matmul %67, %63, %cst_17 {dimension_numbers = #tpu.dot_dimension_numbers<[1], [0], [0], [1], [0, 0, 1, 1], [], []>} : vector<8x384xbf16>, vector<384x24xbf16>, vector<8x24xf32> -> vector<8x24xf32>
    %70 = arith.addf %68, %69 : vector<8x24xf32>
    %cst_18 = arith.constant 6.250000e-02 : f32
    %71 = vector.broadcast %cst_18 : f32 to vector<8x24xf32>
    %72 = arith.mulf %70, %71 : vector<8x24xf32>
    %cst_19 = arith.constant 1.1920929E-7 : f32
    %73 = vector.broadcast %cst_19 : f32 to vector<8x24xf32>
    %74 = arith.addf %72, %73 : vector<8x24xf32>
    %75 = math.rsqrt %74 : vector<8x24xf32>
    %76 = tpu.iota {dimensions = array<i32: 0>} : vector<24x384xi32>
    %77 = tpu.iota {dimensions = array<i32: 1>} : vector<24x384xi32>
    %c16_i32_20 = arith.constant 16 : i32
    %78 = vector.broadcast %c16_i32_20 : i32 to vector<24x384xi32>
    %79 = arith.muli %76, %78 : vector<24x384xi32>
    %80 = arith.cmpi sge, %77, %79 : vector<24x384xi32>
    %c16_i32_21 = arith.constant 16 : i32
    %81 = vector.broadcast %c16_i32_21 : i32 to vector<24x384xi32>
    %82 = arith.addi %79, %81 : vector<24x384xi32>
    %83 = arith.cmpi slt, %77, %82 : vector<24x384xi32>
    %84 = arith.andi %80, %83 : vector<24x384xi1>
    %85 = arith.extui %84 : vector<24x384xi1> to vector<24x384xi32>
    %86 = arith.sitofp %85 : vector<24x384xi32> to vector<24x384xf32>
    %87 = arith.truncf %86 : vector<24x384xf32> to vector<24x384xbf16>
    %88 = arith.truncf %75 : vector<8x24xf32> to vector<8x24xbf16>
    %89 = arith.extf %88 : vector<8x24xbf16> to vector<8x24xf32>
    %90 = arith.subf %75, %89 : vector<8x24xf32>
    %91 = arith.truncf %90 : vector<8x24xf32> to vector<8x24xbf16>
    %cst_22 = arith.constant dense<0.000000e+00> : vector<8x384xf32>
    %92 = tpu.matmul %88, %87, %cst_22 {dimension_numbers = #tpu.dot_dimension_numbers<[1], [0], [0], [1], [0, 0, 1, 1], [], []>} : vector<8x24xbf16>, vector<24x384xbf16>, vector<8x384xf32> -> vector<8x384xf32>
    %cst_23 = arith.constant dense<0.000000e+00> : vector<8x384xf32>
    %93 = tpu.matmul %91, %87, %cst_23 {dimension_numbers = #tpu.dot_dimension_numbers<[1], [0], [0], [1], [0, 0, 1, 1], [], []>} : vector<8x24xbf16>, vector<24x384xbf16>, vector<8x384xf32> -> vector<8x384xf32>
    %94 = arith.addf %92, %93 : vector<8x384xf32>
    %95 = arith.mulf %50, %94 : vector<8x384xf32>
    %c0_24 = arith.constant 0 : index
    %c0_25 = arith.constant 0 : index
    %96 = vector.load %arg6[%c0_24, %c0_25] : memref<8x384xf32, #tpu.memory_space<vmem>>, vector<8x384xf32>
    tpu.vector_store %arg6[%c0_24, %c0_25], %95 {strides = array<i32>} : memref<8x384xf32, #tpu.memory_space<vmem>>, vector<8x384xf32>,
    %97 = arith.mulf %75, %75 : vector<8x24xf32>
    %98 = arith.mulf %72, %97 : vector<8x24xf32>
    %99 = tpu.iota {dimensions = array<i32: 0>} : vector<24x2xi32>
    %100 = tpu.iota {dimensions = array<i32: 1>} : vector<24x2xi32>
    %c12_i32 = arith.constant 12 : i32
    %101 = vector.broadcast %c12_i32 : i32 to vector<24x2xi32>
    %102 = arith.muli %100, %101 : vector<24x2xi32>
    %103 = arith.cmpi sge, %99, %102 : vector<24x2xi32>
    %c12_i32_26 = arith.constant 12 : i32
    %104 = vector.broadcast %c12_i32_26 : i32 to vector<24x2xi32>
    %105 = arith.addi %102, %104 : vector<24x2xi32>
    %106 = arith.cmpi slt, %99, %105 : vector<24x2xi32>
    %107 = arith.andi %103, %106 : vector<24x2xi1>
    %108 = arith.extui %107 : vector<24x2xi1> to vector<24x2xi32>
    %109 = arith.sitofp %108 : vector<24x2xi32> to vector<24x2xf32>
    %110 = arith.truncf %109 : vector<24x2xf32> to vector<24x2xbf16>
    %111 = arith.truncf %98 : vector<8x24xf32> to vector<8x24xbf16>
    %112 = arith.extf %111 : vector<8x24xbf16> to vector<8x24xf32>
    %113 = arith.subf %98, %112 : vector<8x24xf32>
    %114 = arith.truncf %113 : vector<8x24xf32> to vector<8x24xbf16>
    %cst_27 = arith.constant dense<0.000000e+00> : vector<8x2xf32>
    %115 = tpu.matmul %111, %110, %cst_27 {dimension_numbers = #tpu.dot_dimension_numbers<[1], [0], [0], [1], [0, 0, 1, 1], [], []>} : vector<8x24xbf16>, vector<24x2xbf16>, vector<8x2xf32> -> vector<8x2xf32>
    %cst_28 = arith.constant dense<0.000000e+00> : vector<8x2xf32>
    %116 = tpu.matmul %114, %110, %cst_28 {dimension_numbers = #tpu.dot_dimension_numbers<[1], [0], [0], [1], [0, 0, 1, 1], [], []>} : vector<8x24xbf16>, vector<24x2xbf16>, vector<8x2xf32> -> vector<8x2xf32>
    %117 = arith.addf %115, %116 : vector<8x2xf32>
    %cst_29 = arith.constant 0.0833333358 : f32
    %118 = vector.broadcast %cst_29 : f32 to vector<8x2xf32>
    %119 = arith.mulf %117, %118 : vector<8x2xf32>
    %cst_30 = arith.constant 1.000000e-03 : f32
    %120 = vector.broadcast %cst_30 : f32 to vector<8x2xf32>
    %121 = arith.addf %119, %120 : vector<8x2xf32>
    %122 = math.rsqrt %121 : vector<8x2xf32>
    %123 = tpu.iota {dimensions = array<i32: 0>} : vector<2x384xi32>
    %124 = tpu.iota {dimensions = array<i32: 1>} : vector<2x384xi32>
    %c192_i32 = arith.constant 192 : i32
    %125 = vector.broadcast %c192_i32 : i32 to vector<2x384xi32>
    %126 = arith.muli %123, %125 : vector<2x384xi32>
    %127 = arith.cmpi sge, %124, %126 : vector<2x384xi32>
    %c192_i32_31 = arith.constant 192 : i32
    %128 = vector.broadcast %c192_i32_31 : i32 to vector<2x384xi32>
    %129 = arith.addi %126, %128 : vector<2x384xi32>
    %130 = arith.cmpi slt, %124, %129 : vector<2x384xi32>
    %131 = arith.andi %127, %130 : vector<2x384xi1>
    %132 = arith.extui %131 : vector<2x384xi1> to vector<2x384xi32>
    %133 = arith.sitofp %132 : vector<2x384xi32> to vector<2x384xf32>
    %134 = arith.truncf %133 : vector<2x384xf32> to vector<2x384xbf16>
    %135 = arith.truncf %122 : vector<8x2xf32> to vector<8x2xbf16>
    %136 = arith.extf %135 : vector<8x2xbf16> to vector<8x2xf32>
    %137 = arith.subf %122, %136 : vector<8x2xf32>
    %138 = arith.truncf %137 : vector<8x2xf32> to vector<8x2xbf16>
    %cst_32 = arith.constant dense<0.000000e+00> : vector<8x384xf32>
    %139 = tpu.matmul %135, %134, %cst_32 {dimension_numbers = #tpu.dot_dimension_numbers<[1], [0], [0], [1], [0, 0, 1, 1], [], []>} : vector<8x2xbf16>, vector<2x384xbf16>, vector<8x384xf32> -> vector<8x384xf32>
    %cst_33 = arith.constant dense<0.000000e+00> : vector<8x384xf32>
    %140 = tpu.matmul %138, %134, %cst_33 {dimension_numbers = #tpu.dot_dimension_numbers<[1], [0], [0], [1], [0, 0, 1, 1], [], []>} : vector<8x2xbf16>, vector<2x384xbf16>, vector<8x384xf32> -> vector<8x384xf32>
    %141 = arith.addf %139, %140 : vector<8x384xf32>
    %142 = arith.mulf %95, %141 : vector<8x384xf32>
    %c0_34 = arith.constant 0 : index
    %c0_35 = arith.constant 0 : index
    %143 = vector.load %arg4[%c0_34, %c0_35] : memref<1x384xf32, #tpu.memory_space<vmem>>, vector<1x384xf32>
    %144 = vector.broadcast %143 : vector<1x384xf32> to vector<8x384xf32>
    %145 = arith.mulf %142, %144 : vector<8x384xf32>
    %c0_36 = arith.constant 0 : index
    %c0_37 = arith.constant 0 : index
    %146 = vector.load %arg7[%c0_36, %c0_37] : memref<8x384xf32, #tpu.memory_space<vmem>>, vector<8x384xf32>
    tpu.vector_store %arg7[%c0_36, %c0_37], %145 {strides = array<i32>} : memref<8x384xf32, #tpu.memory_space<vmem>>, vector<8x384xf32>,
    return
  }
  func.func @transform_0(%arg0: i32) -> (i32, i32) {
    %c0_i32 = arith.constant 0 : i32
    %c0_i32_0 = arith.constant 0 : i32
    return %arg0, %c0_i32 : i32, i32
  }
  func.func @transform_1(%arg0: i32) -> (i32, i32) {
    %c0_i32 = arith.constant 0 : i32
    %c0_i32_0 = arith.constant 0 : i32
    return %arg0, %c0_i32 : i32, i32
  }
  func.func @transform_2(%arg0: i32) -> (i32, i32) {
    %c0_i32 = arith.constant 0 : i32
    %c0_i32_0 = arith.constant 0 : i32
    %c0_i32_1 = arith.constant 0 : i32
    return %c0_i32, %c0_i32_0 : i32, i32
  }
  func.func @transform_3(%arg0: i32) -> (i32, i32) {
    %c0_i32 = arith.constant 0 : i32
    %c0_i32_0 = arith.constant 0 : i32
    %c0_i32_1 = arith.constant 0 : i32
    return %c0_i32, %c0_i32_0 : i32, i32
  }
  func.func @transform_4(%arg0: i32) -> (i32, i32) {
    %c0_i32 = arith.constant 0 : i32
    %c0_i32_0 = arith.constant 0 : i32
    return %arg0, %c0_i32 : i32, i32
  }
  func.func @transform_5(%arg0: i32) -> (i32, i32) {
    %c0_i32 = arith.constant 0 : i32
    %c0_i32_0 = arith.constant 0 : i32
    return %arg0, %c0_i32 : i32, i32
  }
  func.func @transform_6(%arg0: i32) -> (i32, i32) {
    %c0_i32 = arith.constant 0 : i32
    %c0_i32_0 = arith.constant 0 : i32
    return %arg0, %c0_i32 : i32, i32
  }
}

</mosaic_0001>

<llo_original>
// kernel: model_forward.1
$region0: #{model_forward.1}
  #allocation0 [shape = 'u32[]', space=smem, size = 0x4, offset = 0x4, fixed_abs, tag = 'smem constant byte address 0x4 - core index']
  #allocation1 [shape = 'u32[72,128]{1,0:T(1,128)}', space=vmem, size = 0x9000, scoped, tag = 'internal scratch']
  %s0 = inlined_call_operand.vmem [shape: f32[8,384], index: 0, kind: input, shape index: {}]
  %s1 = inlined_call_operand.vmem [shape: f32[8,384], index: 1, kind: input, shape index: {}]
  %s2 = inlined_call_operand.vmem [shape: f32[1,384], index: 2, kind: input, shape index: {}]
  %s3 = inlined_call_operand.vmem [shape: f32[1,384], index: 3, kind: input, shape index: {}]
  %s4 = inlined_call_operand.vmem [shape: f32[8,384], index: 4, kind: output, shape index: {0}]
  %s5 = inlined_call_operand.vmem [shape: f32[8,384], index: 5, kind: output, shape index: {1}]
  %s6 = inlined_call_operand.vmem [shape: f32[8,384], index: 6, kind: output, shape index: {2}]
  %7 = xla_tuple %s4, %s5, %s6
  %s8 = sld [smem:[#allocation0]]
  $region42: #{model_forward.1} parent=0
    _
  %s10 = ssub.s32 1, %s8
  %s11 = scalar_select 0, %s10, %s8
  // Predicated region
  $region2: #{model_forward.1} parent=0 // pred_check
    _
  $region3: #{model_forward.1} parent=0 // pred_check_branch
    %13 = sbr.rel (0) target = $region5
  $region4: #{model_forward.1} parent=0 // pred_region
    _
  $region5: #{model_forward.1} parent=0 // pred_fallthru
    _
  // Predicated region
  $region6: #{model_forward.1} parent=0 // pred_check
    _
  $region7: #{model_forward.1} parent=0 // pred_check_branch
    %15 = sbr.rel (0) target = $region9
  $region8: #{model_forward.1} parent=0 // pred_region
    _
  $region9: #{model_forward.1} parent=0 // pred_fallthru
    _
  // Predicated region
  $region10: #{model_forward.1} parent=0 // pred_check
    _
  $region11: #{model_forward.1} parent=0 // pred_check_branch
    %17 = sbr.rel (0) target = $region13
  $region12: #{model_forward.1} parent=0 // pred_region
    _
  $region13: #{model_forward.1} parent=0 // pred_fallthru
    _
  // Predicated region
  $region14: #{model_forward.1} parent=0 // pred_check
    _
  $region15: #{model_forward.1} parent=0 // pred_check_branch
    %19 = sbr.rel (0) target = $region17
  $region16: #{model_forward.1} parent=0 // pred_region
    _
  $region17: #{model_forward.1} parent=0 // pred_fallthru
    _
  %v21 = vld [vmem:[%s0] sm:$0xff]
  %v22 = vld [vmem:[%s0 + $0x8] sm:$0xff]
  %v23 = vld [vmem:[%s0 + $0x10] sm:$0xff]
  %v24 = vmul.f32 %v21, %v21
  %v25 = vmul.f32 %v22, %v22
  %v26 = vmul.f32 %v23, %v23
  %v27 = vlaneseq
  %v28 = vshrl.u32 %v27, 7
  %v29 = vadd.s32 %v28, 8
  %v30 = vadd.s32 %v28, 16
  %v31 = vadd.s32 %v28, 24
  %v32 = vadd.s32 %v28, 32
  %v33 = vadd.s32 %v28, 40
  %v34 = vadd.s32 %v28, 48
  %v35 = vadd.s32 %v28, 56
  %v36 = vadd.s32 %v28, 64
  %v37 = vadd.s32 %v28, 72
  %v38 = vadd.s32 %v28, 80
  %v39 = vadd.s32 %v28, 88
  %v40 = vadd.s32 %v28, 96
  %v41 = vadd.s32 %v28, 104
  %v42 = vadd.s32 %v28, 112
  %v43 = vadd.s32 %v28, 120
  %v44 = vadd.s32 %v28, 128
  %v45 = vadd.s32 %v28, 136
  %v46 = vadd.s32 %v28, 144
  %v47 = vadd.s32 %v28, 152
  %v48 = vadd.s32 %v28, 160
  %v49 = vadd.s32 %v28, 168
  %v50 = vadd.s32 %v28, 176
  %v51 = vadd.s32 %v28, 184
  %v52 = vadd.s32 %v28, 192
  %v53 = vadd.s32 %v28, 200
  %v54 = vadd.s32 %v28, 208
  %v55 = vadd.s32 %v28, 216
  %v56 = vadd.s32 %v28, 224
  %v57 = vadd.s32 %v28, 232
  %v58 = vadd.s32 %v28, 240
  %v59 = vadd.s32 %v28, 248
  %v60 = vadd.s32 %v28, 256
  %v61 = vadd.s32 %v28, 264
  %v62 = vadd.s32 %v28, 272
  %v63 = vadd.s32 %v28, 280
  %v64 = vadd.s32 %v28, 288
  %v65 = vadd.s32 %v28, 296
  %v66 = vadd.s32 %v28, 304
  %v67 = vadd.s32 %v28, 312
  %v68 = vadd.s32 %v28, 320
  %v69 = vadd.s32 %v28, 328
  %v70 = vadd.s32 %v28, 336
  %v71 = vadd.s32 %v28, 344
  %v72 = vadd.s32 %v28, 352
  %v73 = vadd.s32 %v28, 360
  %v74 = vadd.s32 %v28, 368
  %v75 = vadd.s32 %v28, 376
  %v76 = vlaneseq
  %v77 = vand.u32 %v76, 127
  %v78 = vmul.u32 %v77, 24
  %vm79 = vcmp.ge.s32.totalorder %v28, %v78
  %vm80 = vcmp.ge.s32.totalorder %v29, %v78
  %vm81 = vcmp.ge.s32.totalorder %v30, %v78
  %vm82 = vcmp.ge.s32.totalorder %v31, %v78
  %vm83 = vcmp.ge.s32.totalorder %v32, %v78
  %vm84 = vcmp.ge.s32.totalorder %v33, %v78
  %vm85 = vcmp.ge.s32.totalorder %v34, %v78
  %vm86 = vcmp.ge.s32.totalorder %v35, %v78
  %vm87 = vcmp.ge.s32.totalorder %v36, %v78
  %vm88 = vcmp.ge.s32.totalorder %v37, %v78
  %vm89 = vcmp.ge.s32.totalorder %v38, %v78
  %vm90 = vcmp.ge.s32.totalorder %v39, %v78
  %vm91 = vcmp.ge.s32.totalorder %v40, %v78
  %vm92 = vcmp.ge.s32.totalorder %v41, %v78
  %vm93 = vcmp.ge.s32.totalorder %v42, %v78
  %vm94 = vcmp.ge.s32.totalorder %v43, %v78
  %vm95 = vcmp.ge.s32.totalorder %v44, %v78
  %vm96 = vcmp.ge.s32.totalorder %v45, %v78
  %vm97 = vcmp.ge.s32.totalorder %v46, %v78
  %vm98 = vcmp.ge.s32.totalorder %v47, %v78
  %vm99 = vcmp.ge.s32.totalorder %v48, %v78
  %vm100 = vcmp.ge.s32.totalorder %v49, %v78
  %vm101 = vcmp.ge.s32.totalorder %v50, %v78
  %vm102 = vcmp.ge.s32.totalorder %v51, %v78
  %vm103 = vcmp.ge.s32.totalorder %v52, %v78
  %vm104 = vcmp.ge.s32.totalorder %v53, %v78
  %vm105 = vcmp.ge.s32.totalorder %v54, %v78
  %vm106 = vcmp.ge.s32.totalorder %v55, %v78
  %vm107 = vcmp.ge.s32.totalorder %v56, %v78
  %vm108 = vcmp.ge.s32.totalorder %v57, %v78
  %vm109 = vcmp.ge.s32.totalorder %v58, %v78
  %vm110 = vcmp.ge.s32.totalorder %v59, %v78
  %vm111 = vcmp.ge.s32.totalorder %v60, %v78
  %vm112 = vcmp.ge.s32.totalorder %v61, %v78
  %vm113 = vcmp.ge.s32.totalorder %v62, %v78
  %vm114 = vcmp.ge.s32.totalorder %v63, %v78
  %vm115 = vcmp.ge.s32.totalorder %v64, %v78
  %vm116 = vcmp.ge.s32.totalorder %v65, %v78
  %vm117 = vcmp.ge.s32.totalorder %v66, %v78
  %vm118 = vcmp.ge.s32.totalorder %v67, %v78
  %vm119 = vcmp.ge.s32.totalorder %v68, %v78
  %vm120 = vcmp.ge.s32.totalorder %v69, %v78
  %vm121 = vcmp.ge.s32.totalorder %v70, %v78
  %vm122 = vcmp.ge.s32.totalorder %v71, %v78
  %vm123 = vcmp.ge.s32.totalorder %v72, %v78
  %vm124 = vcmp.ge.s32.totalorder %v73, %v78
  %vm125 = vcmp.ge.s32.totalorder %v74, %v78
  %vm126 = vcmp.ge.s32.totalorder %v75, %v78
  %v127 = vadd.s32 %v78, 24
  %vm128 = vcmp.lt.s32.totalorder %v28, %v127
  %vm129 = vcmp.lt.s32.totalorder %v29, %v127
  %vm130 = vcmp.lt.s32.totalorder %v30, %v127
  %vm131 = vcmp.lt.s32.totalorder %v31, %v127
  %vm132 = vcmp.lt.s32.totalorder %v32, %v127
  %vm133 = vcmp.lt.s32.totalorder %v33, %v127
  %vm134 = vcmp.lt.s32.totalorder %v34, %v127
  %vm135 = vcmp.lt.s32.totalorder %v35, %v127
  %vm136 = vcmp.lt.s32.totalorder %v36, %v127
  %vm137 = vcmp.lt.s32.totalorder %v37, %v127
  %vm138 = vcmp.lt.s32.totalorder %v38, %v127
  %vm139 = vcmp.lt.s32.totalorder %v39, %v127
  %vm140 = vcmp.lt.s32.totalorder %v40, %v127
  %vm141 = vcmp.lt.s32.totalorder %v41, %v127
  %vm142 = vcmp.lt.s32.totalorder %v42, %v127
  %vm143 = vcmp.lt.s32.totalorder %v43, %v127
  %vm144 = vcmp.lt.s32.totalorder %v44, %v127
  %vm145 = vcmp.lt.s32.totalorder %v45, %v127
  %vm146 = vcmp.lt.s32.totalorder %v46, %v127
  %vm147 = vcmp.lt.s32.totalorder %v47, %v127
  %vm148 = vcmp.lt.s32.totalorder %v48, %v127
  %vm149 = vcmp.lt.s32.totalorder %v49, %v127
  %vm150 = vcmp.lt.s32.totalorder %v50, %v127
  %vm151 = vcmp.lt.s32.totalorder %v51, %v127
  %vm152 = vcmp.lt.s32.totalorder %v52, %v127
  %vm153 = vcmp.lt.s32.totalorder %v53, %v127
  %vm154 = vcmp.lt.s32.totalorder %v54, %v127
  %vm155 = vcmp.lt.s32.totalorder %v55, %v127
  %vm156 = vcmp.lt.s32.totalorder %v56, %v127
  %vm157 = vcmp.lt.s32.totalorder %v57, %v127
  %vm158 = vcmp.lt.s32.totalorder %v58, %v127
  %vm159 = vcmp.lt.s32.totalorder %v59, %v127
  %vm160 = vcmp.lt.s32.totalorder %v60, %v127
  %vm161 = vcmp.lt.s32.totalorder %v61, %v127
  %vm162 = vcmp.lt.s32.totalorder %v62, %v127
  %vm163 = vcmp.lt.s32.totalorder %v63, %v127
  %vm164 = vcmp.lt.s32.totalorder %v64, %v127
  %vm165 = vcmp.lt.s32.totalorder %v65, %v127
  %vm166 = vcmp.lt.s32.totalorder %v66, %v127
  %vm167 = vcmp.lt.s32.totalorder %v67, %v127
  %vm168 = vcmp.lt.s32.totalorder %v68, %v127
  %vm169 = vcmp.lt.s32.totalorder %v69, %v127
  %vm170 = vcmp.lt.s32.totalorder %v70, %v127
  %vm171 = vcmp.lt.s32.totalorder %v71, %v127
  %vm172 = vcmp.lt.s32.totalorder %v72, %v127
  %vm173 = vcmp.lt.s32.totalorder %v73, %v127
  %vm174 = vcmp.lt.s32.totalorder %v74, %v127
  %vm175 = vcmp.lt.s32.totalorder %v75, %v127
  %vm176 = vmand %vm79, %vm128
  %vm177 = vmand %vm80, %vm129
  %vm178 = vmand %vm81, %vm130
  %vm179 = vmand %vm82, %vm131
  %vm180 = vmand %vm83, %vm132
  %vm181 = vmand %vm84, %vm133
  %vm182 = vmand %vm85, %vm134
  %vm183 = vmand %vm86, %vm135
  %vm184 = vmand %vm87, %vm136
  %vm185 = vmand %vm88, %vm137
  %vm186 = vmand %vm89, %vm138
  %vm187 = vmand %vm90, %vm139
  %vm188 = vmand %vm91, %vm140
  %vm189 = vmand %vm92, %vm141
  %vm190 = vmand %vm93, %vm142
  %vm191 = vmand %vm94, %vm143
  %vm192 = vmand %vm95, %vm144
  %vm193 = vmand %vm96, %vm145
  %vm194 = vmand %vm97, %vm146
  %vm195 = vmand %vm98, %vm147
  %vm196 = vmand %vm99, %vm148
  %vm197 = vmand %vm100, %vm149
  %vm198 = vmand %vm101, %vm150
  %vm199 = vmand %vm102, %vm151
  %vm200 = vmand %vm103, %vm152
  %vm201 = vmand %vm104, %vm153
  %vm202 = vmand %vm105, %vm154
  %vm203 = vmand %vm106, %vm155
  %vm204 = vmand %vm107, %vm156
  %vm205 = vmand %vm108, %vm157
  %vm206 = vmand %vm109, %vm158
  %vm207 = vmand %vm110, %vm159
  %vm208 = vmand %vm111, %vm160
  %vm209 = vmand %vm112, %vm161
  %vm210 = vmand %vm113, %vm162
  %vm211 = vmand %vm114, %vm163
  %vm212 = vmand %vm115, %vm164
  %vm213 = vmand %vm116, %vm165
  %vm214 = vmand %vm117, %vm166
  %vm215 = vmand %vm118, %vm167
  %vm216 = vmand %vm119, %vm168
  %vm217 = vmand %vm120, %vm169
  %vm218 = vmand %vm121, %vm170
  %vm219 = vmand %vm122, %vm171
  %vm220 = vmand %vm123, %vm172
  %vm221 = vmand %vm124, %vm173
  %vm222 = vmand %vm125, %vm174
  %vm223 = vmand %vm126, %vm175
  %v224 = vsel %vm176, 1, 0
  %v225 = vsel %vm177, 1, 0
  %v226 = vsel %vm178, 1, 0
  %v227 = vsel %vm179, 1, 0
  %v228 = vsel %vm180, 1, 0
  %v229 = vsel %vm181, 1, 0
  %v230 = vsel %vm182, 1, 0
  %v231 = vsel %vm183, 1, 0
  %v232 = vsel %vm184, 1, 0
  %v233 = vsel %vm185, 1, 0
  %v234 = vsel %vm186, 1, 0
  %v235 = vsel %vm187, 1, 0
  %v236 = vsel %vm188, 1, 0
  %v237 = vsel %vm189, 1, 0
  %v238 = vsel %vm190, 1, 0
  %v239 = vsel %vm191, 1, 0
  %v240 = vsel %vm192, 1, 0
  %v241 = vsel %vm193, 1, 0
  %v242 = vsel %vm194, 1, 0
  %v243 = vsel %vm195, 1, 0
  %v244 = vsel %vm196, 1, 0
  %v245 = vsel %vm197, 1, 0
  %v246 = vsel %vm198, 1, 0
  %v247 = vsel %vm199, 1, 0
  %v248 = vsel %vm200, 1, 0
  %v249 = vsel %vm201, 1, 0
  %v250 = vsel %vm202, 1, 0
  %v251 = vsel %vm203, 1, 0
  %v252 = vsel %vm204, 1, 0
  %v253 = vsel %vm205, 1, 0
  %v254 = vsel %vm206, 1, 0
  %v255 = vsel %vm207, 1, 0
  %v256 = vsel %vm208, 1, 0
  %v257 = vsel %vm209, 1, 0
  %v258 = vsel %vm210, 1, 0
  %v259 = vsel %vm211, 1, 0
  %v260 = vsel %vm212, 1, 0
  %v261 = vsel %vm213, 1, 0
  %v262 = vsel %vm214, 1, 0
  %v263 = vsel %vm215, 1, 0
  %v264 = vsel %vm216, 1, 0
  %v265 = vsel %vm217, 1, 0
  %v266 = vsel %vm218, 1, 0
  %v267 = vsel %vm219, 1, 0
  %v268 = vsel %vm220, 1, 0
  %v269 = vsel %vm221, 1, 0
  %v270 = vsel %vm222, 1, 0
  %v271 = vsel %vm223, 1, 0
  %v272 = vcvt.s32.f32 %v224
  %v273 = vcvt.s32.f32 %v225
  %v274 = vcvt.s32.f32 %v226
  %v275 = vcvt.s32.f32 %v227
  %v276 = vcvt.s32.f32 %v228
  %v277 = vcvt.s32.f32 %v229
  %v278 = vcvt.s32.f32 %v230
  %v279 = vcvt.s32.f32 %v231
  %v280 = vcvt.s32.f32 %v232
  %v281 = vcvt.s32.f32 %v233
  %v282 = vcvt.s32.f32 %v234
  %v283 = vcvt.s32.f32 %v235
  %v284 = vcvt.s32.f32 %v236
  %v285 = vcvt.s32.f32 %v237
  %v286 = vcvt.s32.f32 %v238
  %v287 = vcvt.s32.f32 %v239
  %v288 = vcvt.s32.f32 %v240
  %v289 = vcvt.s32.f32 %v241
  %v290 = vcvt.s32.f32 %v242
  %v291 = vcvt.s32.f32 %v243
  %v292 = vcvt.s32.f32 %v244
  %v293 = vcvt.s32.f32 %v245
  %v294 = vcvt.s32.f32 %v246
  %v295 = vcvt.s32.f32 %v247
  %v296 = vcvt.s32.f32 %v248
  %v297 = vcvt.s32.f32 %v249
  %v298 = vcvt.s32.f32 %v250
  %v299 = vcvt.s32.f32 %v251
  %v300 = vcvt.s32.f32 %v252
  %v301 = vcvt.s32.f32 %v253
  %v302 = vcvt.s32.f32 %v254
  %v303 = vcvt.s32.f32 %v255
  %v304 = vcvt.s32.f32 %v256
  %v305 = vcvt.s32.f32 %v257
  %v306 = vcvt.s32.f32 %v258
  %v307 = vcvt.s32.f32 %v259
  %v308 = vcvt.s32.f32 %v260
  %v309 = vcvt.s32.f32 %v261
  %v310 = vcvt.s32.f32 %v262
  %v311 = vcvt.s32.f32 %v263
  %v312 = vcvt.s32.f32 %v264
  %v313 = vcvt.s32.f32 %v265
  %v314 = vcvt.s32.f32 %v266
  %v315 = vcvt.s32.f32 %v267
  %v316 = vcvt.s32.f32 %v268
  %v317 = vcvt.s32.f32 %v269
  %v318 = vcvt.s32.f32 %v270
  %v319 = vcvt.s32.f32 %v271
  %v320 = vpack.c.bf16 %v273, %v272
  %v321 = vpack.c.bf16 %v275, %v274
  %v322 = vpack.c.bf16 %v277, %v276
  %v323 = vpack.c.bf16 %v279, %v278
  %v324 = vpack.c.bf16 %v281, %v280
  %v325 = vpack.c.bf16 %v283, %v282
  %v326 = vpack.c.bf16 %v285, %v284
  %v327 = vpack.c.bf16 %v287, %v286
  %v328 = vpack.c.bf16 %v289, %v288
  %v329 = vpack.c.bf16 %v291, %v290
  %v330 = vpack.c.bf16 %v293, %v292
  %v331 = vpack.c.bf16 %v295, %v294
  %v332 = vpack.c.bf16 %v297, %v296
  %v333 = vpack.c.bf16 %v299, %v298
  %v334 = vpack.c.bf16 %v301, %v300
  %v335 = vpack.c.bf16 %v303, %v302
  %v336 = vpack.c.bf16 %v305, %v304
  %v337 = vpack.c.bf16 %v307, %v306
  %v338 = vpack.c.bf16 %v309, %v308
  %v339 = vpack.c.bf16 %v311, %v310
  %v340 = vpack.c.bf16 %v313, %v312
  %v341 = vpack.c.bf16 %v315, %v314
  %v342 = vpack.c.bf16 %v317, %v316
  %v343 = vpack.c.bf16 %v319, %v318
  %v344 = vpack.c.bf16 %v25, %v24
  %v345 = vpack.c.bf16 %v26, %v26
  %v346 = vunpack.c.l.bf16 %v344
  %v347 = vunpack.c.h.bf16 %v344
  %v348 = vunpack.c.l.bf16 %v345
  %v349 = vsub.f32 %v24, %v346
  %v350 = vsub.f32 %v25, %v347
  %v351 = vsub.f32 %v26, %v348
  %v352 = vpack.c.bf16 %v349, %v349
  %v353 = vpack.c.bf16 %v350, %v350
  %v354 = vpack.c.bf16 %v351, %v351
  %355 = vmatpush.bf16.msra.mxu0 %v327
  %356 = vmatpush.bf16.msra.mxu0 %v326
  %357 = vmatpush.bf16.msra.mxu0 %v325
  %358 = vmatpush.bf16.msra.mxu0 %v324
  %359 = vmatpush.bf16.msra.mxu0 %v323
  %360 = vmatpush.bf16.msra.mxu0 %v322
  %361 = vmatpush.bf16.msra.mxu0 %v321
  %362 = vmatpush.bf16.msra.mxu0 %v320
  %363 = vmatmul.bf16.gmra.mxu0 %v352
  %v364 = vpop.f32.mrf.mxu0
  %v365 = vadd.f32 0.0, %v364
  %v366 = vpop.f32.mrf.mxu0
  %367 = vdwg.mxu0
  %368 = vmatpush.bf16.msra.mxu0 %v335
  %369 = vmatpush.bf16.msra.mxu0 %v334
  %370 = vmatpush.bf16.msra.mxu0 %v333
  %371 = vmatpush.bf16.msra.mxu0 %v332
  %372 = vmatpush.bf16.msra.mxu0 %v331
  %373 = vmatpush.bf16.msra.mxu0 %v330
  %374 = vmatpush.bf16.msra.mxu0 %v329
  %375 = vmatpush.bf16.msra.mxu0 %v328
  %376 = vmatmul.bf16.gmra.mxu0 %v353
  %v377 = vpop.f32.mrf.mxu0
  %v378 = vadd.f32 %v365, %v377
  %v379 = vpop.f32.mrf.mxu0
  %380 = vdwg.mxu0
  %381 = vmatpush.bf16.msra.mxu0 %v343
  %382 = vmatpush.bf16.msra.mxu0 %v342
  %383 = vmatpush.bf16.msra.mxu0 %v341
  %384 = vmatpush.bf16.msra.mxu0 %v340
  %385 = vmatpush.bf16.msra.mxu0 %v339
  %386 = vmatpush.bf16.msra.mxu0 %v338
  %387 = vmatpush.bf16.msra.mxu0 %v337
  %388 = vmatpush.bf16.msra.mxu0 %v336
  %389 = vmatmul.bf16.gmra.mxu0 %v354
  %v390 = vpop.f32.mrf.mxu0
  %v391 = vadd.f32 %v378, %v390
  %v392 = vpop.f32.mrf.mxu0
  %393 = vdwg.mxu0
  %v396 = vunpack.c.l.b16 %v344
  %v397 = vunpack.c.h.b16 %v344
  %v398 = vunpack.c.l.b16 %v345
  %v399 = vpack.c.b16 %v396, %v396
  %v400 = vpack.c.b16 %v397, %v397
  %v401 = vpack.c.b16 %v398, %v398
  %405 = vmatpush.bf16.msra.mxu0 %v327
  %406 = vmatpush.bf16.msra.mxu0 %v326
  %407 = vmatpush.bf16.msra.mxu0 %v325
  %408 = vmatpush.bf16.msra.mxu0 %v324
  %409 = vmatpush.bf16.msra.mxu0 %v323
  %410 = vmatpush.bf16.msra.mxu0 %v322
  %411 = vmatpush.bf16.msra.mxu0 %v321
  %412 = vmatpush.bf16.msra.mxu0 %v320
  %413 = vmatmul.bf16.gmra.mxu0 %v399
  %v414 = vpop.f32.mrf.mxu0
  %v415 = vadd.f32 %v391, %v414
  %v416 = vpop.f32.mrf.mxu0
  %417 = vdwg.mxu0
  %418 = vmatpush.bf16.msra.mxu0 %v335
  %419 = vmatpush.bf16.msra.mxu0 %v334
  %420 = vmatpush.bf16.msra.mxu0 %v333
  %421 = vmatpush.bf16.msra.mxu0 %v332
  %422 = vmatpush.bf16.msra.mxu0 %v331
  %423 = vmatpush.bf16.msra.mxu0 %v330
  %424 = vmatpush.bf16.msra.mxu0 %v329
  %425 = vmatpush.bf16.msra.mxu0 %v328
  %426 = vmatmul.bf16.gmra.mxu0 %v400
  %v427 = vpop.f32.mrf.mxu0
  %v428 = vadd.f32 %v415, %v427
  %v429 = vpop.f32.mrf.mxu0
  %430 = vdwg.mxu0
  %431 = vmatpush.bf16.msra.mxu0 %v343
  %432 = vmatpush.bf16.msra.mxu0 %v342
  %433 = vmatpush.bf16.msra.mxu0 %v341
  %434 = vmatpush.bf16.msra.mxu0 %v340
  %435 = vmatpush.bf16.msra.mxu0 %v339
  %436 = vmatpush.bf16.msra.mxu0 %v338
  %437 = vmatpush.bf16.msra.mxu0 %v337
  %438 = vmatpush.bf16.msra.mxu0 %v336
  %439 = vmatmul.bf16.gmra.mxu0 %v401
  %v440 = vpop.f32.mrf.mxu0
  %v441 = vadd.f32 %v428, %v440
  %v442 = vpop.f32.mrf.mxu0
  %443 = vdwg.mxu0
  %v444 = vmul.f32 %v441, 0.041666668
  %v445 = vadd.f32 %v444, 1.1920929e-07
  %v446 = vrsqrt.pop %v445
  %v447 = vmul.f32 %v446, %v445
  %v448 = vmul.f32 %v447, %v446
  %v449 = vmul.f32 0.5, %v448
  %v450 = vsub.f32 1.5, %v449
  %v451 = vmul.f32 %v446, %v450
  %vm452 = vweird.f32 %v445
  %vm453 = vweird.f32 %v446
  %vm454 = vmor %vm452, %vm453
  %v455 = vsel %vm454, %v446, %v451
  %v456 = vadd.s32 %v77, 128
  %v457 = vadd.s32 %v77, 256
  %v458 = vmul.u32 %v28, 24
  %v459 = vmul.u32 %v29, 24
  %vm460 = vcmp.ge.s32.totalorder %v77, %v458
  %vm461 = vcmp.ge.s32.totalorder %v456, %v458
  %vm462 = vcmp.ge.s32.totalorder %v457, %v458
  %vm463 = vcmp.ge.s32.totalorder %v77, %v459
  %vm464 = vcmp.ge.s32.totalorder %v456, %v459
  %vm465 = vcmp.ge.s32.totalorder %v457, %v459
  %v466 = vadd.s32 %v458, 24
  %v467 = vadd.s32 %v459, 24
  %vm468 = vcmp.lt.s32.totalorder %v77, %v466
  %vm469 = vcmp.lt.s32.totalorder %v456, %v466
  %vm470 = vcmp.lt.s32.totalorder %v457, %v466
  %vm471 = vcmp.lt.s32.totalorder %v77, %v467
  %vm472 = vcmp.lt.s32.totalorder %v456, %v467
  %vm473 = vcmp.lt.s32.totalorder %v457, %v467
  %vm474 = vmand %vm460, %vm468
  %vm475 = vmand %vm461, %vm469
  %vm476 = vmand %vm462, %vm470
  %vm477 = vmand %vm463, %vm471
  %vm478 = vmand %vm464, %vm472
  %vm479 = vmand %vm465, %vm473
  %v480 = vsel %vm474, 1, 0
  %v481 = vsel %vm475, 1, 0
  %v482 = vsel %vm476, 1, 0
  %v483 = vsel %vm477, 1, 0
  %v484 = vsel %vm478, 1, 0
  %v485 = vsel %vm479, 1, 0
  %v486 = vcvt.s32.f32 %v480
  %v487 = vcvt.s32.f32 %v481
  %v488 = vcvt.s32.f32 %v482
  %v489 = vcvt.s32.f32 %v483
  %v490 = vcvt.s32.f32 %v484
  %v491 = vcvt.s32.f32 %v485
  %v492 = vpack.c.bf16 %v489, %v486
  %v493 = vpack.c.bf16 %v490, %v487
  %v494 = vpack.c.bf16 %v491, %v488
  %v495 = vpack.c.bf16 %v455, %v455
  %v496 = vunpack.c.l.bf16 %v495
  %v497 = vsub.f32 %v455, %v496
  %v498 = vpack.c.bf16 %v497, %v497
  %vm499 = vcmask 130048
  %v501 = vsel %vm499, %v498, 0
  %503 = vmatpush.bf16.msra.mxu0 0
  %504 = vmatpush.bf16.msra.mxu0 0
  %505 = vmatpush.bf16.msra.mxu0 0
  %506 = vmatpush.bf16.msra.mxu0 0
  %507 = vmatpush.bf16.msra.mxu0 0
  %508 = vmatpush.bf16.msra.mxu0 0
  %509 = vmatpush.bf16.msra.mxu0 0
  %510 = vmatpush.bf16.msra.mxu0 %v492
  %511 = vmatmul.bf16.gmra.mxu0 %v501
  %v512 = vpop.f32.mrf.mxu0
  %v513 = vadd.f32 0.0, %v512
  %v514 = vpop.f32.mrf.mxu0
  %515 = vdwg.mxu0
  %516 = vmatpush.bf16.msra.mxu0 0
  %517 = vmatpush.bf16.msra.mxu0 0
  %518 = vmatpush.bf16.msra.mxu0 0
  %519 = vmatpush.bf16.msra.mxu0 0
  %520 = vmatpush.bf16.msra.mxu0 0
  %521 = vmatpush.bf16.msra.mxu0 0
  %522 = vmatpush.bf16.msra.mxu0 0
  %523 = vmatpush.bf16.msra.mxu0 %v493
  %524 = vmatmul.bf16.gmra.mxu0 %v501
  %v525 = vpop.f32.mrf.mxu0
  %v526 = vadd.f32 0.0, %v525
  %v527 = vpop.f32.mrf.mxu0
  %528 = vdwg.mxu0
  %529 = vmatpush.bf16.msra.mxu0 0
  %530 = vmatpush.bf16.msra.mxu0 0
  %531 = vmatpush.bf16.msra.mxu0 0
  %532 = vmatpush.bf16.msra.mxu0 0
  %533 = vmatpush.bf16.msra.mxu0 0
  %534 = vmatpush.bf16.msra.mxu0 0
  %535 = vmatpush.bf16.msra.mxu0 0
  %536 = vmatpush.bf16.msra.mxu0 %v494
  %537 = vmatmul.bf16.gmra.mxu0 %v501
  %v538 = vpop.f32.mrf.mxu0
  %v539 = vadd.f32 0.0, %v538
  %v540 = vpop.f32.mrf.mxu0
  %541 = vdwg.mxu0
  %v543 = vsel %vm499, %v495, 0
  %545 = vmatpush.bf16.msra.mxu0 0
  %546 = vmatpush.bf16.msra.mxu0 0
  %547 = vmatpush.bf16.msra.mxu0 0
  %548 = vmatpush.bf16.msra.mxu0 0
  %549 = vmatpush.bf16.msra.mxu0 0
  %550 = vmatpush.bf16.msra.mxu0 0
  %551 = vmatpush.bf16.msra.mxu0 0
  %552 = vmatpush.bf16.msra.mxu0 %v492
  %553 = vmatmul.bf16.gmra.mxu0 %v543
  %v554 = vpop.f32.mrf.mxu0
  %v555 = vadd.f32 %v513, %v554
  %v556 = vpop.f32.mrf.mxu0
  %557 = vdwg.mxu0
  %558 = vmatpush.bf16.msra.mxu0 0
  %559 = vmatpush.bf16.msra.mxu0 0
  %560 = vmatpush.bf16.msra.mxu0 0
  %561 = vmatpush.bf16.msra.mxu0 0
  %562 = vmatpush.bf16.msra.mxu0 0
  %563 = vmatpush.bf16.msra.mxu0 0
  %564 = vmatpush.bf16.msra.mxu0 0
  %565 = vmatpush.bf16.msra.mxu0 %v493
  %566 = vmatmul.bf16.gmra.mxu0 %v543
  %v567 = vpop.f32.mrf.mxu0
  %v568 = vadd.f32 %v526, %v567
  %v569 = vpop.f32.mrf.mxu0
  %570 = vdwg.mxu0
  %571 = vmatpush.bf16.msra.mxu0 0
  %572 = vmatpush.bf16.msra.mxu0 0
  %573 = vmatpush.bf16.msra.mxu0 0
  %574 = vmatpush.bf16.msra.mxu0 0
  %575 = vmatpush.bf16.msra.mxu0 0
  %576 = vmatpush.bf16.msra.mxu0 0
  %577 = vmatpush.bf16.msra.mxu0 0
  %578 = vmatpush.bf16.msra.mxu0 %v494
  %579 = vmatmul.bf16.gmra.mxu0 %v543
  %v580 = vpop.f32.mrf.mxu0
  %v581 = vadd.f32 %v539, %v580
  %v582 = vpop.f32.mrf.mxu0
  %583 = vdwg.mxu0
  %v584 = vmul.f32 %v21, %v555
  %v585 = vmul.f32 %v22, %v568
  %v586 = vmul.f32 %v23, %v581
  %v587 = vld [vmem:[%s2] sm:$0x7]
  %v589 = vperm.slane %v587, 0
  %v590 = vperm.slane %v587, 1
  %v591 = vperm.slane %v587, 2
  %v595 = vmul.f32 %v584, %v589
  %v596 = vmul.f32 %v585, %v590
  %v597 = vmul.f32 %v586, %v591
  %598 = vst [vmem:[%s4] sm:$0xff] %v595
  %599 = vst [vmem:[%s4 + $0x8] sm:$0xff] %v596
  %600 = vst [vmem:[%s4 + $0x10] sm:$0xff] %v597
  %v601 = vld [vmem:[%s1] sm:$0xff]
  %v602 = vld [vmem:[%s1 + $0x8] sm:$0xff]
  %v603 = vld [vmem:[%s1 + $0x10] sm:$0xff]
  %v604 = vmul.f32 %v601, %v601
  %v605 = vmul.f32 %v602, %v602
  %v606 = vmul.f32 %v603, %v603
  %v607 = vmul.u32 %v77, 16
  %vm608 = vcmp.ge.s32.totalorder %v28, %v607
  %vm609 = vcmp.ge.s32.totalorder %v29, %v607
  %vm610 = vcmp.ge.s32.totalorder %v30, %v607
  %vm611 = vcmp.ge.s32.totalorder %v31, %v607
  %vm612 = vcmp.ge.s32.totalorder %v32, %v607
  %vm613 = vcmp.ge.s32.totalorder %v33, %v607
  %vm614 = vcmp.ge.s32.totalorder %v34, %v607
  %vm615 = vcmp.ge.s32.totalorder %v35, %v607
  %vm616 = vcmp.ge.s32.totalorder %v36, %v607
  %vm617 = vcmp.ge.s32.totalorder %v37, %v607
  %vm618 = vcmp.ge.s32.totalorder %v38, %v607
  %vm619 = vcmp.ge.s32.totalorder %v39, %v607
  %vm620 = vcmp.ge.s32.totalorder %v40, %v607
  %vm621 = vcmp.ge.s32.totalorder %v41, %v607
  %vm622 = vcmp.ge.s32.totalorder %v42, %v607
  %vm623 = vcmp.ge.s32.totalorder %v43, %v607
  %vm624 = vcmp.ge.s32.totalorder %v44, %v607
  %vm625 = vcmp.ge.s32.totalorder %v45, %v607
  %vm626 = vcmp.ge.s32.totalorder %v46, %v607
  %vm627 = vcmp.ge.s32.totalorder %v47, %v607
  %vm628 = vcmp.ge.s32.totalorder %v48, %v607
  %vm629 = vcmp.ge.s32.totalorder %v49, %v607
  %vm630 = vcmp.ge.s32.totalorder %v50, %v607
  %vm631 = vcmp.ge.s32.totalorder %v51, %v607
  %vm632 = vcmp.ge.s32.totalorder %v52, %v607
  %vm633 = vcmp.ge.s32.totalorder %v53, %v607
  %vm634 = vcmp.ge.s32.totalorder %v54, %v607
  %vm635 = vcmp.ge.s32.totalorder %v55, %v607
  %vm636 = vcmp.ge.s32.totalorder %v56, %v607
  %vm637 = vcmp.ge.s32.totalorder %v57, %v607
  %vm638 = vcmp.ge.s32.totalorder %v58, %v607
  %vm639 = vcmp.ge.s32.totalorder %v59, %v607
  %vm640 = vcmp.ge.s32.totalorder %v60, %v607
  %vm641 = vcmp.ge.s32.totalorder %v61, %v607
  %vm642 = vcmp.ge.s32.totalorder %v62, %v607
  %vm643 = vcmp.ge.s32.totalorder %v63, %v607
  %vm644 = vcmp.ge.s32.totalorder %v64, %v607
  %vm645 = vcmp.ge.s32.totalorder %v65, %v607
  %vm646 = vcmp.ge.s32.totalorder %v66, %v607
  %vm647 = vcmp.ge.s32.totalorder %v67, %v607
  %vm648 = vcmp.ge.s32.totalorder %v68, %v607
  %vm649 = vcmp.ge.s32.totalorder %v69, %v607
  %vm650 = vcmp.ge.s32.totalorder %v70, %v607
  %vm651 = vcmp.ge.s32.totalorder %v71, %v607
  %vm652 = vcmp.ge.s32.totalorder %v72, %v607
  %vm653 = vcmp.ge.s32.totalorder %v73, %v607
  %vm654 = vcmp.ge.s32.totalorder %v74, %v607
  %vm655 = vcmp.ge.s32.totalorder %v75, %v607
  %v656 = vadd.s32 %v607, 16
  %vm657 = vcmp.lt.s32.totalorder %v28, %v656
  %vm658 = vcmp.lt.s32.totalorder %v29, %v656
  %vm659 = vcmp.lt.s32.totalorder %v30, %v656
  %vm660 = vcmp.lt.s32.totalorder %v31, %v656
  %vm661 = vcmp.lt.s32.totalorder %v32, %v656
  %vm662 = vcmp.lt.s32.totalorder %v33, %v656
  %vm663 = vcmp.lt.s32.totalorder %v34, %v656
  %vm664 = vcmp.lt.s32.totalorder %v35, %v656
  %vm665 = vcmp.lt.s32.totalorder %v36, %v656
  %vm666 = vcmp.lt.s32.totalorder %v37, %v656
  %vm667 = vcmp.lt.s32.totalorder %v38, %v656
  %vm668 = vcmp.lt.s32.totalorder %v39, %v656
  %vm669 = vcmp.lt.s32.totalorder %v40, %v656
  %vm670 = vcmp.lt.s32.totalorder %v41, %v656
  %vm671 = vcmp.lt.s32.totalorder %v42, %v656
  %vm672 = vcmp.lt.s32.totalorder %v43, %v656
  %vm673 = vcmp.lt.s32.totalorder %v44, %v656
  %vm674 = vcmp.lt.s32.totalorder %v45, %v656
  %vm675 = vcmp.lt.s32.totalorder %v46, %v656
  %vm676 = vcmp.lt.s32.totalorder %v47, %v656
  %vm677 = vcmp.lt.s32.totalorder %v48, %v656
  %vm678 = vcmp.lt.s32.totalorder %v49, %v656
  %vm679 = vcmp.lt.s32.totalorder %v50, %v656
  %vm680 = vcmp.lt.s32.totalorder %v51, %v656
  %vm681 = vcmp.lt.s32.totalorder %v52, %v656
  %vm682 = vcmp.lt.s32.totalorder %v53, %v656
  %vm683 = vcmp.lt.s32.totalorder %v54, %v656
  %vm684 = vcmp.lt.s32.totalorder %v55, %v656
  %vm685 = vcmp.lt.s32.totalorder %v56, %v656
  %vm686 = vcmp.lt.s32.totalorder %v57, %v656
  %vm687 = vcmp.lt.s32.totalorder %v58, %v656
  %vm688 = vcmp.lt.s32.totalorder %v59, %v656
  %vm689 = vcmp.lt.s32.totalorder %v60, %v656
  %vm690 = vcmp.lt.s32.totalorder %v61, %v656
  %vm691 = vcmp.lt.s32.totalorder %v62, %v656
  %vm692 = vcmp.lt.s32.totalorder %v63, %v656
  %vm693 = vcmp.lt.s32.totalorder %v64, %v656
  %vm694 = vcmp.lt.s32.totalorder %v65, %v656
  %vm695 = vcmp.lt.s32.totalorder %v66, %v656
  %vm696 = vcmp.lt.s32.totalorder %v67, %v656
  %vm697 = vcmp.lt.s32.totalorder %v68, %v656
  %vm698 = vcmp.lt.s32.totalorder %v69, %v656
  %vm699 = vcmp.lt.s32.totalorder %v70, %v656
  %vm700 = vcmp.lt.s32.totalorder %v71, %v656
  %vm701 = vcmp.lt.s32.totalorder %v72, %v656
  %vm702 = vcmp.lt.s32.totalorder %v73, %v656
  %vm703 = vcmp.lt.s32.totalorder %v74, %v656
  %vm704 = vcmp.lt.s32.totalorder %v75, %v656
  %vm705 = vmand %vm608, %vm657
  %vm706 = vmand %vm609, %vm658
  %vm707 = vmand %vm610, %vm659
  %vm708 = vmand %vm611, %vm660
  %vm709 = vmand %vm612, %vm661
  %vm710 = vmand %vm613, %vm662
  %vm711 = vmand %vm614, %vm663
  %vm712 = vmand %vm615, %vm664
  %vm713 = vmand %vm616, %vm665
  %vm714 = vmand %vm617, %vm666
  %vm715 = vmand %vm618, %vm667
  %vm716 = vmand %vm619, %vm668
  %vm717 = vmand %vm620, %vm669
  %vm718 = vmand %vm621, %vm670
  %vm719 = vmand %vm622, %vm671
  %vm720 = vmand %vm623, %vm672
  %vm721 = vmand %vm624, %vm673
  %vm722 = vmand %vm625, %vm674
  %vm723 = vmand %vm626, %vm675
  %vm724 = vmand %vm627, %vm676
  %vm725 = vmand %vm628, %vm677
  %vm726 = vmand %vm629, %vm678
  %vm727 = vmand %vm630, %vm679
  %vm728 = vmand %vm631, %vm680
  %vm729 = vmand %vm632, %vm681
  %vm730 = vmand %vm633, %vm682
  %vm731 = vmand %vm634, %vm683
  %vm732 = vmand %vm635, %vm684
  %vm733 = vmand %vm636, %vm685
  %vm734 = vmand %vm637, %vm686
  %vm735 = vmand %vm638, %vm687
  %vm736 = vmand %vm639, %vm688
  %vm737 = vmand %vm640, %vm689
  %vm738 = vmand %vm641, %vm690
  %vm739 = vmand %vm642, %vm691
  %vm740 = vmand %vm643, %vm692
  %vm741 = vmand %vm644, %vm693
  %vm742 = vmand %vm645, %vm694
  %vm743 = vmand %vm646, %vm695
  %vm744 = vmand %vm647, %vm696
  %vm745 = vmand %vm648, %vm697
  %vm746 = vmand %vm649, %vm698
  %vm747 = vmand %vm650, %vm699
  %vm748 = vmand %vm651, %vm700
  %vm749 = vmand %vm652, %vm701
  %vm750 = vmand %vm653, %vm702
  %vm751 = vmand %vm654, %vm703
  %vm752 = vmand %vm655, %vm704
  %v753 = vsel %vm705, 1, 0
  %v754 = vsel %vm706, 1, 0
  %v755 = vsel %vm707, 1, 0
  %v756 = vsel %vm708, 1, 0
  %v757 = vsel %vm709, 1, 0
  %v758 = vsel %vm710, 1, 0
  %v759 = vsel %vm711, 1, 0
  %v760 = vsel %vm712, 1, 0
  %v761 = vsel %vm713, 1, 0
  %v762 = vsel %vm714, 1, 0
  %v763 = vsel %vm715, 1, 0
  %v764 = vsel %vm716, 1, 0
  %v765 = vsel %vm717, 1, 0
  %v766 = vsel %vm718, 1, 0
  %v767 = vsel %vm719, 1, 0
  %v768 = vsel %vm720, 1, 0
  %v769 = vsel %vm721, 1, 0
  %v770 = vsel %vm722, 1, 0
  %v771 = vsel %vm723, 1, 0
  %v772 = vsel %vm724, 1, 0
  %v773 = vsel %vm725, 1, 0
  %v774 = vsel %vm726, 1, 0
  %v775 = vsel %vm727, 1, 0
  %v776 = vsel %vm728, 1, 0
  %v777 = vsel %vm729, 1, 0
  %v778 = vsel %vm730, 1, 0
  %v779 = vsel %vm731, 1, 0
  %v780 = vsel %vm732, 1, 0
  %v781 = vsel %vm733, 1, 0
  %v782 = vsel %vm734, 1, 0
  %v783 = vsel %vm735, 1, 0
  %v784 = vsel %vm736, 1, 0
  %v785 = vsel %vm737, 1, 0
  %v786 = vsel %vm738, 1, 0
  %v787 = vsel %vm739, 1, 0
  %v788 = vsel %vm740, 1, 0
  %v789 = vsel %vm741, 1, 0
  %v790 = vsel %vm742, 1, 0
  %v791 = vsel %vm743, 1, 0
  %v792 = vsel %vm744, 1, 0
  %v793 = vsel %vm745, 1, 0
  %v794 = vsel %vm746, 1, 0
  %v795 = vsel %vm747, 1, 0
  %v796 = vsel %vm748, 1, 0
  %v797 = vsel %vm749, 1, 0
  %v798 = vsel %vm750, 1, 0
  %v799 = vsel %vm751, 1, 0
  %v800 = vsel %vm752, 1, 0
  %v801 = vcvt.s32.f32 %v753
  %v802 = vcvt.s32.f32 %v754
  %v803 = vcvt.s32.f32 %v755
  %v804 = vcvt.s32.f32 %v756
  %v805 = vcvt.s32.f32 %v757
  %v806 = vcvt.s32.f32 %v758
  %v807 = vcvt.s32.f32 %v759
  %v808 = vcvt.s32.f32 %v760
  %v809 = vcvt.s32.f32 %v761
  %v810 = vcvt.s32.f32 %v762
  %v811 = vcvt.s32.f32 %v763
  %v812 = vcvt.s32.f32 %v764
  %v813 = vcvt.s32.f32 %v765
  %v814 = vcvt.s32.f32 %v766
  %v815 = vcvt.s32.f32 %v767
  %v816 = vcvt.s32.f32 %v768
  %v817 = vcvt.s32.f32 %v769
  %v818 = vcvt.s32.f32 %v770
  %v819 = vcvt.s32.f32 %v771
  %v820 = vcvt.s32.f32 %v772
  %v821 = vcvt.s32.f32 %v773
  %v822 = vcvt.s32.f32 %v774
  %v823 = vcvt.s32.f32 %v775
  %v824 = vcvt.s32.f32 %v776
  %v825 = vcvt.s32.f32 %v777
  %v826 = vcvt.s32.f32 %v778
  %v827 = vcvt.s32.f32 %v779
  %v828 = vcvt.s32.f32 %v780
  %v829 = vcvt.s32.f32 %v781
  %v830 = vcvt.s32.f32 %v782
  %v831 = vcvt.s32.f32 %v783
  %v832 = vcvt.s32.f32 %v784
  %v833 = vcvt.s32.f32 %v785
  %v834 = vcvt.s32.f32 %v786
  %v835 = vcvt.s32.f32 %v787
  %v836 = vcvt.s32.f32 %v788
  %v837 = vcvt.s32.f32 %v789
  %v838 = vcvt.s32.f32 %v790
  %v839 = vcvt.s32.f32 %v791
  %v840 = vcvt.s32.f32 %v792
  %v841 = vcvt.s32.f32 %v793
  %v842 = vcvt.s32.f32 %v794
  %v843 = vcvt.s32.f32 %v795
  %v844 = vcvt.s32.f32 %v796
  %v845 = vcvt.s32.f32 %v797
  %v846 = vcvt.s32.f32 %v798
  %v847 = vcvt.s32.f32 %v799
  %v848 = vcvt.s32.f32 %v800
  %v849 = vpack.c.bf16 %v802, %v801
  %v850 = vpack.c.bf16 %v804, %v803
  %v851 = vpack.c.bf16 %v806, %v805
  %v852 = vpack.c.bf16 %v808, %v807
  %v853 = vpack.c.bf16 %v810, %v809
  %v854 = vpack.c.bf16 %v812, %v811
  %v855 = vpack.c.bf16 %v814, %v813
  %v856 = vpack.c.bf16 %v816, %v815
  %v857 = vpack.c.bf16 %v818, %v817
  %v858 = vpack.c.bf16 %v820, %v819
  %v859 = vpack.c.bf16 %v822, %v821
  %v860 = vpack.c.bf16 %v824, %v823
  %v861 = vpack.c.bf16 %v826, %v825
  %v862 = vpack.c.bf16 %v828, %v827
  %v863 = vpack.c.bf16 %v830, %v829
  %v864 = vpack.c.bf16 %v832, %v831
  %v865 = vpack.c.bf16 %v834, %v833
  %v866 = vpack.c.bf16 %v836, %v835
  %v867 = vpack.c.bf16 %v838, %v837
  %v868 = vpack.c.bf16 %v840, %v839
  %v869 = vpack.c.bf16 %v842, %v841
  %v870 = vpack.c.bf16 %v844, %v843
  %v871 = vpack.c.bf16 %v846, %v845
  %v872 = vpack.c.bf16 %v848, %v847
  %v873 = vpack.c.bf16 %v605, %v604
  %v874 = vpack.c.bf16 %v606, %v606
  %v875 = vunpack.c.l.bf16 %v873
  %v876 = vunpack.c.h.bf16 %v873
  %v877 = vunpack.c.l.bf16 %v874
  %v878 = vsub.f32 %v604, %v875
  %v879 = vsub.f32 %v605, %v876
  %v880 = vsub.f32 %v606, %v877
  %v881 = vpack.c.bf16 %v878, %v878
  %v882 = vpack.c.bf16 %v879, %v879
  %v883 = vpack.c.bf16 %v880, %v880
  %884 = vmatpush.bf16.msra.mxu0 %v856
  %885 = vmatpush.bf16.msra.mxu0 %v855
  %886 = vmatpush.bf16.msra.mxu0 %v854
  %887 = vmatpush.bf16.msra.mxu0 %v853
  %888 = vmatpush.bf16.msra.mxu0 %v852
  %889 = vmatpush.bf16.msra.mxu0 %v851
  %890 = vmatpush.bf16.msra.mxu0 %v850
  %891 = vmatpush.bf16.msra.mxu0 %v849
  %892 = vmatmul.bf16.gmra.mxu0 %v881
  %v893 = vpop.f32.mrf.mxu0
  %v894 = vadd.f32 0.0, %v893
  %v895 = vpop.f32.mrf.mxu0
  %896 = vdwg.mxu0
  %897 = vmatpush.bf16.msra.mxu0 %v864
  %898 = vmatpush.bf16.msra.mxu0 %v863
  %899 = vmatpush.bf16.msra.mxu0 %v862
  %900 = vmatpush.bf16.msra.mxu0 %v861
  %901 = vmatpush.bf16.msra.mxu0 %v860
  %902 = vmatpush.bf16.msra.mxu0 %v859
  %903 = vmatpush.bf16.msra.mxu0 %v858
  %904 = vmatpush.bf16.msra.mxu0 %v857
  %905 = vmatmul.bf16.gmra.mxu0 %v882
  %v906 = vpop.f32.mrf.mxu0
  %v907 = vadd.f32 %v894, %v906
  %v908 = vpop.f32.mrf.mxu0
  %909 = vdwg.mxu0
  %910 = vmatpush.bf16.msra.mxu0 %v872
  %911 = vmatpush.bf16.msra.mxu0 %v871
  %912 = vmatpush.bf16.msra.mxu0 %v870
  %913 = vmatpush.bf16.msra.mxu0 %v869
  %914 = vmatpush.bf16.msra.mxu0 %v868
  %915 = vmatpush.bf16.msra.mxu0 %v867
  %916 = vmatpush.bf16.msra.mxu0 %v866
  %917 = vmatpush.bf16.msra.mxu0 %v865
  %918 = vmatmul.bf16.gmra.mxu0 %v883
  %v919 = vpop.f32.mrf.mxu0
  %v920 = vadd.f32 %v907, %v919
  %v921 = vpop.f32.mrf.mxu0
  %922 = vdwg.mxu0
  %v925 = vunpack.c.l.b16 %v873
  %v926 = vunpack.c.h.b16 %v873
  %v927 = vunpack.c.l.b16 %v874
  %v928 = vpack.c.b16 %v925, %v925
  %v929 = vpack.c.b16 %v926, %v926
  %v930 = vpack.c.b16 %v927, %v927
  %934 = vmatpush.bf16.msra.mxu0 %v856
  %935 = vmatpush.bf16.msra.mxu0 %v855
  %936 = vmatpush.bf16.msra.mxu0 %v854
  %937 = vmatpush.bf16.msra.mxu0 %v853
  %938 = vmatpush.bf16.msra.mxu0 %v852
  %939 = vmatpush.bf16.msra.mxu0 %v851
  %940 = vmatpush.bf16.msra.mxu0 %v850
  %941 = vmatpush.bf16.msra.mxu0 %v849
  %942 = vmatmul.bf16.gmra.mxu0 %v928
  %v943 = vpop.f32.mrf.mxu0
  %v944 = vadd.f32 %v920, %v943
  %v945 = vpop.f32.mrf.mxu0
  %946 = vdwg.mxu0
  %947 = vmatpush.bf16.msra.mxu0 %v864
  %948 = vmatpush.bf16.msra.mxu0 %v863
  %949 = vmatpush.bf16.msra.mxu0 %v862
  %950 = vmatpush.bf16.msra.mxu0 %v861
  %951 = vmatpush.bf16.msra.mxu0 %v860
  %952 = vmatpush.bf16.msra.mxu0 %v859
  %953 = vmatpush.bf16.msra.mxu0 %v858
  %954 = vmatpush.bf16.msra.mxu0 %v857
  %955 = vmatmul.bf16.gmra.mxu0 %v929
  %v956 = vpop.f32.mrf.mxu0
  %v957 = vadd.f32 %v944, %v956
  %v958 = vpop.f32.mrf.mxu0
  %959 = vdwg.mxu0
  %960 = vmatpush.bf16.msra.mxu0 %v872
  %961 = vmatpush.bf16.msra.mxu0 %v871
  %962 = vmatpush.bf16.msra.mxu0 %v870
  %963 = vmatpush.bf16.msra.mxu0 %v869
  %964 = vmatpush.bf16.msra.mxu0 %v868
  %965 = vmatpush.bf16.msra.mxu0 %v867
  %966 = vmatpush.bf16.msra.mxu0 %v866
  %967 = vmatpush.bf16.msra.mxu0 %v865
  %968 = vmatmul.bf16.gmra.mxu0 %v930
  %v969 = vpop.f32.mrf.mxu0
  %v970 = vadd.f32 %v957, %v969
  %v971 = vpop.f32.mrf.mxu0
  %972 = vdwg.mxu0
  %v973 = vmul.f32 %v970, 0.0625
  %v974 = vadd.f32 %v973, 1.1920929e-07
  %v975 = vrsqrt.pop %v974
  %v976 = vmul.f32 %v975, %v974
  %v977 = vmul.f32 %v976, %v975
  %v978 = vmul.f32 0.5, %v977
  %v979 = vsub.f32 1.5, %v978
  %v980 = vmul.f32 %v975, %v979
  %vm981 = vweird.f32 %v974
  %vm982 = vweird.f32 %v975
  %vm983 = vmor %vm981, %vm982
  %v984 = vsel %vm983, %v975, %v980
  %v985 = vmul.u32 %v28, 16
  %v986 = vmul.u32 %v29, 16
  %v987 = vmul.u32 %v30, 16
  %vm988 = vcmp.ge.s32.totalorder %v77, %v985
  %vm989 = vcmp.ge.s32.totalorder %v456, %v985
  %vm990 = vcmp.ge.s32.totalorder %v457, %v985
  %vm991 = vcmp.ge.s32.totalorder %v77, %v986
  %vm992 = vcmp.ge.s32.totalorder %v456, %v986
  %vm993 = vcmp.ge.s32.totalorder %v457, %v986
  %vm994 = vcmp.ge.s32.totalorder %v77, %v987
  %vm995 = vcmp.ge.s32.totalorder %v456, %v987
  %vm996 = vcmp.ge.s32.totalorder %v457, %v987
  %v997 = vadd.s32 %v985, 16
  %v998 = vadd.s32 %v986, 16
  %v999 = vadd.s32 %v987, 16
  %vm1000 = vcmp.lt.s32.totalorder %v77, %v997
  %vm1001 = vcmp.lt.s32.totalorder %v456, %v997
  %vm1002 = vcmp.lt.s32.totalorder %v457, %v997
  %vm1003 = vcmp.lt.s32.totalorder %v77, %v998
  %vm1004 = vcmp.lt.s32.totalorder %v456, %v998
  %vm1005 = vcmp.lt.s32.totalorder %v457, %v998
  %vm1006 = vcmp.lt.s32.totalorder %v77, %v999
  %vm1007 = vcmp.lt.s32.totalorder %v456, %v999
  %vm1008 = vcmp.lt.s32.totalorder %v457, %v999
  %vm1009 = vmand %vm988, %vm1000
  %vm1010 = vmand %vm989, %vm1001
  %vm1011 = vmand %vm990, %vm1002
  %vm1012 = vmand %vm991, %vm1003
  %vm1013 = vmand %vm992, %vm1004
  %vm1014 = vmand %vm993, %vm1005
  %vm1015 = vmand %vm994, %vm1006
  %vm1016 = vmand %vm995, %vm1007
  %vm1017 = vmand %vm996, %vm1008
  %v1018 = vsel %vm1009, 1, 0
  %v1019 = vsel %vm1010, 1, 0
  %v1020 = vsel %vm1011, 1, 0
  %v1021 = vsel %vm1012, 1, 0
  %v1022 = vsel %vm1013, 1, 0
  %v1023 = vsel %vm1014, 1, 0
  %v1024 = vsel %vm1015, 1, 0
  %v1025 = vsel %vm1016, 1, 0
  %v1026 = vsel %vm1017, 1, 0
  %v1027 = vcvt.s32.f32 %v1018
  %v1028 = vcvt.s32.f32 %v1019
  %v1029 = vcvt.s32.f32 %v1020
  %v1030 = vcvt.s32.f32 %v1021
  %v1031 = vcvt.s32.f32 %v1022
  %v1032 = vcvt.s32.f32 %v1023
  %v1033 = vcvt.s32.f32 %v1024
  %v1034 = vcvt.s32.f32 %v1025
  %v1035 = vcvt.s32.f32 %v1026
  %v1036 = vpack.c.bf16 %v1030, %v1027
  %v1037 = vpack.c.bf16 %v1031, %v1028
  %v1038 = vpack.c.bf16 %v1032, %v1029
  %v1039 = vpack.c.bf16 %v1033, %v1033
  %v1040 = vpack.c.bf16 %v1034, %v1034
  %v1041 = vpack.c.bf16 %v1035, %v1035
  %v1042 = vpack.c.bf16 %v984, %v984
  %v1043 = vunpack.c.l.bf16 %v1042
  %v1044 = vsub.f32 %v984, %v1043
  %v1045 = vpack.c.bf16 %v1044, %v1044
  %vm1046 = vcmask 195584
  %v1048 = vsel %vm1046, %v1045, 0
  %vm1050 = vcmask 1043456
  %v1052 = vsel %vm1050, %v1039, 0
  %v1055 = vsel %vm1050, %v1040, 0
  %v1058 = vsel %vm1050, %v1041, 0
  %1060 = vmatpush.bf16.msra.mxu0 0
  %1061 = vmatpush.bf16.msra.mxu0 0
  %1062 = vmatpush.bf16.msra.mxu0 0
  %1063 = vmatpush.bf16.msra.mxu0 0
  %1064 = vmatpush.bf16.msra.mxu0 0
  %1065 = vmatpush.bf16.msra.mxu0 0
  %1066 = vmatpush.bf16.msra.mxu0 %v1052
  %1067 = vmatpush.bf16.msra.mxu0 %v1036
  %1068 = vmatmul.bf16.gmra.mxu0 %v1048
  %v1069 = vpop.f32.mrf.mxu0
  %v1070 = vadd.f32 0.0, %v1069
  %v1071 = vpop.f32.mrf.mxu0
  %1072 = vdwg.mxu0
  %1073 = vmatpush.bf16.msra.mxu0 0
  %1074 = vmatpush.bf16.msra.mxu0 0
  %1075 = vmatpush.bf16.msra.mxu0 0
  %1076 = vmatpush.bf16.msra.mxu0 0
  %1077 = vmatpush.bf16.msra.mxu0 0
  %1078 = vmatpush.bf16.msra.mxu0 0
  %1079 = vmatpush.bf16.msra.mxu0 %v1055
  %1080 = vmatpush.bf16.msra.mxu0 %v1037
  %1081 = vmatmul.bf16.gmra.mxu0 %v1048
  %v1082 = vpop.f32.mrf.mxu0
  %v1083 = vadd.f32 0.0, %v1082
  %v1084 = vpop.f32.mrf.mxu0
  %1085 = vdwg.mxu0
  %1086 = vmatpush.bf16.msra.mxu0 0
  %1087 = vmatpush.bf16.msra.mxu0 0
  %1088 = vmatpush.bf16.msra.mxu0 0
  %1089 = vmatpush.bf16.msra.mxu0 0
  %1090 = vmatpush.bf16.msra.mxu0 0
  %1091 = vmatpush.bf16.msra.mxu0 0
  %1092 = vmatpush.bf16.msra.mxu0 %v1058
  %1093 = vmatpush.bf16.msra.mxu0 %v1038
  %1094 = vmatmul.bf16.gmra.mxu0 %v1048
  %v1095 = vpop.f32.mrf.mxu0
  %v1096 = vadd.f32 0.0, %v1095
  %v1097 = vpop.f32.mrf.mxu0
  %1098 = vdwg.mxu0
  %v1100 = vsel %vm1046, %v1042, 0
  %1102 = vmatpush.bf16.msra.mxu0 0
  %1103 = vmatpush.bf16.msra.mxu0 0
  %1104 = vmatpush.bf16.msra.mxu0 0
  %1105 = vmatpush.bf16.msra.mxu0 0
  %1106 = vmatpush.bf16.msra.mxu0 0
  %1107 = vmatpush.bf16.msra.mxu0 0
  %1108 = vmatpush.bf16.msra.mxu0 %v1052
  %1109 = vmatpush.bf16.msra.mxu0 %v1036
  %1110 = vmatmul.bf16.gmra.mxu0 %v1100
  %v1111 = vpop.f32.mrf.mxu0
  %v1112 = vadd.f32 %v1070, %v1111
  %v1113 = vpop.f32.mrf.mxu0
  %1114 = vdwg.mxu0
  %1115 = vmatpush.bf16.msra.mxu0 0
  %1116 = vmatpush.bf16.msra.mxu0 0
  %1117 = vmatpush.bf16.msra.mxu0 0
  %1118 = vmatpush.bf16.msra.mxu0 0
  %1119 = vmatpush.bf16.msra.mxu0 0
  %1120 = vmatpush.bf16.msra.mxu0 0
  %1121 = vmatpush.bf16.msra.mxu0 %v1055
  %1122 = vmatpush.bf16.msra.mxu0 %v1037
  %1123 = vmatmul.bf16.gmra.mxu0 %v1100
  %v1124 = vpop.f32.mrf.mxu0
  %v1125 = vadd.f32 %v1083, %v1124
  %v1126 = vpop.f32.mrf.mxu0
  %1127 = vdwg.mxu0
  %1128 = vmatpush.bf16.msra.mxu0 0
  %1129 = vmatpush.bf16.msra.mxu0 0
  %1130 = vmatpush.bf16.msra.mxu0 0
  %1131 = vmatpush.bf16.msra.mxu0 0
  %1132 = vmatpush.bf16.msra.mxu0 0
  %1133 = vmatpush.bf16.msra.mxu0 0
  %1134 = vmatpush.bf16.msra.mxu0 %v1058
  %1135 = vmatpush.bf16.msra.mxu0 %v1038
  %1136 = vmatmul.bf16.gmra.mxu0 %v1100
  %v1137 = vpop.f32.mrf.mxu0
  %v1138 = vadd.f32 %v1096, %v1137
  %v1139 = vpop.f32.mrf.mxu0
  %1140 = vdwg.mxu0
  %v1141 = vmul.f32 %v601, %v1112
  %v1142 = vmul.f32 %v602, %v1125
  %v1143 = vmul.f32 %v603, %v1138
  %1144 = vst [vmem:[%s5] sm:$0xff] %v1141
  %1145 = vst [vmem:[%s5 + $0x8] sm:$0xff] %v1142
  %1146 = vst [vmem:[%s5 + $0x10] sm:$0xff] %v1143
  %v1147 = vmul.f32 %v984, %v984
  %v1148 = vmul.f32 %v973, %v1147
  %v1149 = vmul.u32 %v77, 12
  %vm1150 = vcmp.ge.s32.totalorder %v28, %v1149
  %vm1151 = vcmp.ge.s32.totalorder %v29, %v1149
  %vm1152 = vcmp.ge.s32.totalorder %v30, %v1149
  %v1153 = vadd.s32 %v1149, 12
  %vm1154 = vcmp.lt.s32.totalorder %v28, %v1153
  %vm1155 = vcmp.lt.s32.totalorder %v29, %v1153
  %vm1156 = vcmp.lt.s32.totalorder %v30, %v1153
  %vm1157 = vmand %vm1150, %vm1154
  %vm1158 = vmand %vm1151, %vm1155
  %vm1159 = vmand %vm1152, %vm1156
  %v1160 = vsel %vm1157, 1, 0
  %v1161 = vsel %vm1158, 1, 0
  %v1162 = vsel %vm1159, 1, 0
  %v1163 = vcvt.s32.f32 %v1160
  %v1164 = vcvt.s32.f32 %v1161
  %v1165 = vcvt.s32.f32 %v1162
  %v1166 = vpack.c.bf16 %v1164, %v1163
  %v1167 = vpack.c.bf16 %v1165, %v1165
  %v1168 = vpack.c.bf16 %v1148, %v1148
  %v1169 = vunpack.c.l.bf16 %v1168
  %v1170 = vsub.f32 %v1148, %v1169
  %v1171 = vpack.c.bf16 %v1170, %v1170
  %v1173 = vsel %vm1046, %v1171, 0
  %v1176 = vsel %vm1050, %v1167, 0
  %1178 = vmatpush.bf16.msra.mxu0 0
  %1179 = vmatpush.bf16.msra.mxu0 0
  %1180 = vmatpush.bf16.msra.mxu0 0
  %1181 = vmatpush.bf16.msra.mxu0 0
  %1182 = vmatpush.bf16.msra.mxu0 0
  %1183 = vmatpush.bf16.msra.mxu0 0
  %1184 = vmatpush.bf16.msra.mxu0 %v1176
  %1185 = vmatpush.bf16.msra.mxu0 %v1166
  %1186 = vmatmul.bf16.gmra.mxu0 %v1173
  %v1187 = vpop.f32.mrf.mxu0
  %v1188 = vadd.f32 0.0, %v1187
  %v1189 = vpop.f32.mrf.mxu0
  %1190 = vdwg.mxu0
  %v1192 = vsel %vm1046, %v1168, 0
  %1194 = vmatpush.bf16.msra.mxu0 0
  %1195 = vmatpush.bf16.msra.mxu0 0
  %1196 = vmatpush.bf16.msra.mxu0 0
  %1197 = vmatpush.bf16.msra.mxu0 0
  %1198 = vmatpush.bf16.msra.mxu0 0
  %1199 = vmatpush.bf16.msra.mxu0 0
  %1200 = vmatpush.bf16.msra.mxu0 %v1176
  %1201 = vmatpush.bf16.msra.mxu0 %v1166
  %1202 = vmatmul.bf16.gmra.mxu0 %v1192
  %v1203 = vpop.f32.mrf.mxu0
  %v1204 = vadd.f32 %v1188, %v1203
  %v1205 = vpop.f32.mrf.mxu0
  %1206 = vdwg.mxu0
  %v1207 = vmul.f32 %v1204, 0.083333336
  %v1208 = vadd.f32 %v1207, 0.001
  %v1209 = vrsqrt.pop %v1208
  %v1210 = vmul.f32 %v1209, %v1208
  %v1211 = vmul.f32 %v1210, %v1209
  %v1212 = vmul.f32 0.5, %v1211
  %v1213 = vsub.f32 1.5, %v1212
  %v1214 = vmul.f32 %v1209, %v1213
  %vm1215 = vweird.f32 %v1208
  %vm1216 = vweird.f32 %v1209
  %vm1217 = vmor %vm1215, %vm1216
  %v1218 = vsel %vm1217, %v1209, %v1214
  %v1219 = vmul.u32 %v28, 192
  %vm1220 = vcmp.ge.s32.totalorder %v77, %v1219
  %vm1221 = vcmp.ge.s32.totalorder %v456, %v1219
  %vm1222 = vcmp.ge.s32.totalorder %v457, %v1219
  %v1223 = vadd.s32 %v1219, 192
  %vm1224 = vcmp.lt.s32.totalorder %v77, %v1223
  %vm1225 = vcmp.lt.s32.totalorder %v456, %v1223
  %vm1226 = vcmp.lt.s32.totalorder %v457, %v1223
  %vm1227 = vmand %vm1220, %vm1224
  %vm1228 = vmand %vm1221, %vm1225
  %vm1229 = vmand %vm1222, %vm1226
  %v1230 = vsel %vm1227, 1, 0
  %v1231 = vsel %vm1228, 1, 0
  %v1232 = vsel %vm1229, 1, 0
  %v1233 = vcvt.s32.f32 %v1230
  %v1234 = vcvt.s32.f32 %v1231
  %v1235 = vcvt.s32.f32 %v1232
  %v1236 = vpack.c.bf16 %v1233, %v1233
  %v1237 = vpack.c.bf16 %v1234, %v1234
  %v1238 = vpack.c.bf16 %v1235, %v1235
  %v1239 = vpack.c.bf16 %v1218, %v1218
  %v1240 = vunpack.c.l.bf16 %v1239
  %v1241 = vsub.f32 %v1218, %v1240
  %v1242 = vpack.c.bf16 %v1241, %v1241
  %vm1243 = vcmask 15360
  %v1245 = vsel %vm1243, %v1242, 0
  %vm1247 = vcmask 1040384
  %v1249 = vsel %vm1247, %v1236, 0
  %v1252 = vsel %vm1247, %v1237, 0
  %v1255 = vsel %vm1247, %v1238, 0
  %1257 = vmatpush.bf16.msra.mxu0 0
  %1258 = vmatpush.bf16.msra.mxu0 0
  %1259 = vmatpush.bf16.msra.mxu0 0
  %1260 = vmatpush.bf16.msra.mxu0 0
  %1261 = vmatpush.bf16.msra.mxu0 0
  %1262 = vmatpush.bf16.msra.mxu0 0
  %1263 = vmatpush.bf16.msra.mxu0 0
  %1264 = vmatpush.bf16.msra.mxu0 %v1249
  %1265 = vmatmul.bf16.gmra.mxu0 %v1245
  %v1266 = vpop.f32.mrf.mxu0
  %v1267 = vadd.f32 0.0, %v1266
  %v1268 = vpop.f32.mrf.mxu0
  %1269 = vdwg.mxu0
  %1270 = vmatpush.bf16.msra.mxu0 0
  %1271 = vmatpush.bf16.msra.mxu0 0
  %1272 = vmatpush.bf16.msra.mxu0 0
  %1273 = vmatpush.bf16.msra.mxu0 0
  %1274 = vmatpush.bf16.msra.mxu0 0
  %1275 = vmatpush.bf16.msra.mxu0 0
  %1276 = vmatpush.bf16.msra.mxu0 0
  %1277 = vmatpush.bf16.msra.mxu0 %v1252
  %1278 = vmatmul.bf16.gmra.mxu0 %v1245
  %v1279 = vpop.f32.mrf.mxu0
  %v1280 = vadd.f32 0.0, %v1279
  %v1281 = vpop.f32.mrf.mxu0
  %1282 = vdwg.mxu0
  %1283 = vmatpush.bf16.msra.mxu0 0
  %1284 = vmatpush.bf16.msra.mxu0 0
  %1285 = vmatpush.bf16.msra.mxu0 0
  %1286 = vmatpush.bf16.msra.mxu0 0
  %1287 = vmatpush.bf16.msra.mxu0 0
  %1288 = vmatpush.bf16.msra.mxu0 0
  %1289 = vmatpush.bf16.msra.mxu0 0
  %1290 = vmatpush.bf16.msra.mxu0 %v1255
  %1291 = vmatmul.bf16.gmra.mxu0 %v1245
  %v1292 = vpop.f32.mrf.mxu0
  %v1293 = vadd.f32 0.0, %v1292
  %v1294 = vpop.f32.mrf.mxu0
  %1295 = vdwg.mxu0
  %v1297 = vsel %vm1243, %v1239, 0
  %1299 = vmatpush.bf16.msra.mxu0 0
  %1300 = vmatpush.bf16.msra.mxu0 0
  %1301 = vmatpush.bf16.msra.mxu0 0
  %1302 = vmatpush.bf16.msra.mxu0 0
  %1303 = vmatpush.bf16.msra.mxu0 0
  %1304 = vmatpush.bf16.msra.mxu0 0
  %1305 = vmatpush.bf16.msra.mxu0 0
  %1306 = vmatpush.bf16.msra.mxu0 %v1249
  %1307 = vmatmul.bf16.gmra.mxu0 %v1297
  %v1308 = vpop.f32.mrf.mxu0
  %v1309 = vadd.f32 %v1267, %v1308
  %v1310 = vpop.f32.mrf.mxu0
  %1311 = vdwg.mxu0
  %1312 = vmatpush.bf16.msra.mxu0 0
  %1313 = vmatpush.bf16.msra.mxu0 0
  %1314 = vmatpush.bf16.msra.mxu0 0
  %1315 = vmatpush.bf16.msra.mxu0 0
  %1316 = vmatpush.bf16.msra.mxu0 0
  %1317 = vmatpush.bf16.msra.mxu0 0
  %1318 = vmatpush.bf16.msra.mxu0 0
  %1319 = vmatpush.bf16.msra.mxu0 %v1252
  %1320 = vmatmul.bf16.gmra.mxu0 %v1297
  %v1321 = vpop.f32.mrf.mxu0
  %v1322 = vadd.f32 %v1280, %v1321
  %v1323 = vpop.f32.mrf.mxu0
  %1324 = vdwg.mxu0
  %1325 = vmatpush.bf16.msra.mxu0 0
  %1326 = vmatpush.bf16.msra.mxu0 0
  %1327 = vmatpush.bf16.msra.mxu0 0
  %1328 = vmatpush.bf16.msra.mxu0 0
  %1329 = vmatpush.bf16.msra.mxu0 0
  %1330 = vmatpush.bf16.msra.mxu0 0
  %1331 = vmatpush.bf16.msra.mxu0 0
  %1332 = vmatpush.bf16.msra.mxu0 %v1255
  %1333 = vmatmul.bf16.gmra.mxu0 %v1297
  %v1334 = vpop.f32.mrf.mxu0
  %v1335 = vadd.f32 %v1293, %v1334
  %v1336 = vpop.f32.mrf.mxu0
  %1337 = vdwg.mxu0
  %v1338 = vmul.f32 %v1141, %v1309
  %v1339 = vmul.f32 %v1142, %v1322
  %v1340 = vmul.f32 %v1143, %v1335
  %v1341 = vld [vmem:[%s3] sm:$0x7]
  %v1343 = vperm.slane %v1341, 0
  %v1344 = vperm.slane %v1341, 1
  %v1345 = vperm.slane %v1341, 2
  %v1349 = vmul.f32 %v1338, %v1343
  %v1350 = vmul.f32 %v1339, %v1344
  %v1351 = vmul.f32 %v1340, %v1345
  %1352 = vst [vmem:[%s6] sm:$0xff] %v1349
  %1353 = vst [vmem:[%s6 + $0x8] sm:$0xff] %v1350
  %1354 = vst [vmem:[%s6 + $0x10] sm:$0xff] %v1351
  // Predicated region
  $region18: #{model_forward.1} parent=0 // pred_check
    _
  $region19: #{model_forward.1} parent=0 // pred_check_branch
    %1356 = sbr.rel (0) target = $region21
  $region20: #{model_forward.1} parent=0 // pred_region
    _
  $region21: #{model_forward.1} parent=0 // pred_fallthru
    _
  // Predicated region
  $region22: #{model_forward.1} parent=0 // pred_check
    _
  $region23: #{model_forward.1} parent=0 // pred_check_branch
    %1358 = sbr.rel (0) target = $region25
  $region24: #{model_forward.1} parent=0 // pred_region
    _
  $region25: #{model_forward.1} parent=0 // pred_fallthru
    _
  // Predicated region
  $region26: #{model_forward.1} parent=0 // pred_check
    _
  $region27: #{model_forward.1} parent=0 // pred_check_branch
    %1360 = sbr.rel (0) target = $region29
  $region28: #{model_forward.1} parent=0 // pred_region
    _
  $region29: #{model_forward.1} parent=0 // pred_fallthru
    _
  // Predicated region
  $region30: #{model_forward.1} parent=0 // pred_check
    _
  $region31: #{model_forward.1} parent=0 // pred_check_branch
    %1362 = sbr.rel (0) target = $region33
  $region32: #{model_forward.1} parent=0 // pred_region
    _
  $region33: #{model_forward.1} parent=0 // pred_fallthru
    _
  // Predicated region
  $region34: #{model_forward.1} parent=0 // pred_check
    _
  $region35: #{model_forward.1} parent=0 // pred_check_branch
    %1364 = sbr.rel (0) target = $region37
  $region36: #{model_forward.1} parent=0 // pred_region
    _
  $region37: #{model_forward.1} parent=0 // pred_fallthru
    _
  // Predicated region
  $region38: #{model_forward.1} parent=0 // pred_check
    _
  $region39: #{model_forward.1} parent=0 // pred_check_branch
    %1366 = sbr.rel (0) target = $region41
  $region40: #{model_forward.1} parent=0 // pred_region
    _
  $region41: #{model_forward.1} parent=0 // pred_fallthru
    _

</llo_original>
